<compile_context>
chip_gen: v6e
topology: v6e:2x2x1
jax: 0.10.0
libtpu: 0.0.40
codegen_flags: <defaults>
</compile_context>

<pallas_src>
import functools
import inspect

import jax
import jax.numpy as jnp
from jax.experimental import pallas as pl
from jax.experimental.pallas import tpu as pltpu

NUM_CLASSES = 10
IN_FEATURES = 784          # layer-1 contraction dim kept un-padded (784 = 49 * 16)
OUT_PAD = 128              # lane-dense output slab width (cols 0..9 = softmax score)
NEG_INF = -1e30

LAYER_SIZES = [(784, 512), (512, 256), (256, 256), (256, 128), (128, 10)]


def _round_up(x, m):
    return (x + m - 1) // m * m


def _cdiv(a, b):
    return -(-a // b)


def _choose_tile(n, tile_n):
    """Batch tile: multiple of 16 (bf16 sublanes); prefer an even grid-step count
    so v7x's 2 TensorCores split ("parallel") the grid evenly."""
    tile = max(16, min(_round_up(tile_n, 16), _round_up(n, 16)))
    steps = _cdiv(n, tile)
    if steps > 1 and steps % 2 == 1:
        alt = _round_up(_cdiv(n, steps + 1), 16)
        if alt >= 16 and _cdiv(n, alt) % 2 == 0:
            tile = alt
    return tile


def _resident_spec_kwargs():
    """Single-buffer the VMEM-resident weights/biases (constant index maps) when this
    JAX version supports BlockSpec(pipeline_mode=...)."""
    try:
        if hasattr(pl, "Buffered") and \
                "pipeline_mode" in inspect.signature(pl.BlockSpec).parameters:
            return {"pipeline_mode": pl.Buffered(1)}
    except Exception:
        pass
    return {}


def mlp_kernel(x_ref, lbl_ref,
               w1_ref, b1_ref, w2_ref, b2_ref, w3_ref, b3_ref,
               w4_ref, b4_ref, w5_ref, b5_ref,
               score_ref, nll_ref, *, n_valid):
    """One batch tile: 5 linears + ReLU + masked softmax + CE(softmax) partial loss."""

    def linear(h_bf16, w_ref, b_ref):
        # bf16 operands on the MXU, f32 accumulation; f32 bias add.
        return jnp.dot(h_bf16, w_ref[...],
                       preferred_element_type=jnp.float32) + b_ref[...]

    x = x_ref[...]                                                        # (T, 784) bf16
    h = jnp.maximum(linear(x, w1_ref, b1_ref), 0.0)                       # 784 -> 512
    h = jnp.maximum(linear(h.astype(jnp.bfloat16), w2_ref, b2_ref), 0.0)  # 512 -> 256
    h = jnp.maximum(linear(h.astype(jnp.bfloat16), w3_ref, b3_ref), 0.0)  # 256 -> 256
    h = jnp.maximum(linear(h.astype(jnp.bfloat16), w4_ref, b4_ref), 0.0)  # 256 -> 128
    logits = linear(h.astype(jnp.bfloat16), w5_ref, b5_ref)               # (T, 128) f32

    t, width = logits.shape
    col = jax.lax.broadcasted_iota(jnp.int32, (t, width), 1)
    valid_col = col < NUM_CLASSES

    # Softmax over the 10 real classes; padded columns masked to -inf -> prob 0.
    # pl.reciprocal(approx=True): divide stays on the EUP slot; rows sum to 1 only to
    # approx-reciprocal accuracy (well inside the 1e-2 test tolerance).
    ml = jnp.where(valid_col, logits, NEG_INF)
    m = jnp.max(ml, axis=1, keepdims=True)
    e = jnp.exp(ml - m)
    score = e * pl.reciprocal(jnp.sum(e, axis=1, keepdims=True), approx=True)

    # F.cross_entropy applied to the *softmax output* (faithful to the PyTorch forward):
    # nll_i = logsumexp(score_i[:10]) - score_i[label_i].
    # score <= 1, so a fixed shift of 1.0 replaces the second max-reduction
    # (mathematically identical, numerically safe, one fewer XLU reduce).
    es = jnp.exp(jnp.where(valid_col, score, NEG_INF) - 1.0)
    lse = jnp.log(jnp.sum(es, axis=1, keepdims=True)) + 1.0
    onehot = (col == lbl_ref[...]).astype(jnp.float32)                    # labels (T, 1) int32
    picked = jnp.sum(onehot * score, axis=1, keepdims=True)
    nll = lse - picked                                                    # (T, 1) f32

    # Mask rows that are batch padding (global row >= true N) out of the loss sum.
    row = pl.program_id(0) * t + jax.lax.broadcasted_iota(jnp.int32, (t, 1), 0)
    tile_nll = jnp.sum(jnp.where(row < n_valid, nll, 0.0), axis=0, keepdims=True)  # (1, 1)

    score_ref[...] = score.astype(score_ref.dtype)                        # bf16 score slab
    nll_ref[...] = jnp.broadcast_to(tile_nll, nll_ref.shape)              # (8, 128) f32 partial


def mlp_forward(img, labels, kernel_params, *, tile_n=1024):
    """img: (N, C, H, W) with C*H*W == 784; labels: (N,) int. Returns {'score','loss'}."""
    n = img.shape[0]
    tile = _choose_tile(n, tile_n)
    n_pad = _round_up(n, tile)
    num_tiles = n_pad // tile

    # Fused wrapper preprocessing: flatten (view), cast to bf16 FIRST, then one row pad.
    x = jnp.pad(img.reshape(n, -1).astype(jnp.bfloat16), ((0, n_pad - n), (0, 0)))
    lbl = jnp.pad(labels.astype(jnp.int32), (0, n_pad - n)).reshape(n_pad, 1)

    resident = _resident_spec_kwargs()
    in_specs = [
        pl.BlockSpec((tile, IN_FEATURES), lambda i: (i, 0)),   # x tile (pipelined)
        pl.BlockSpec((tile, 1), lambda i: (i, 0)),             # labels tile
    ]
    # Weights/biases: full-array blocks with constant index maps -> resident in VMEM.
    in_specs += [pl.BlockSpec(p.shape, lambda i: (0, 0), **resident)
                 for p in kernel_params]

    score_slab, nll_part = pl.pallas_call(
        functools.partial(mlp_kernel, n_valid=n),
        grid=(num_tiles,),
        in_specs=in_specs,
        out_specs=(
            pl.BlockSpec((tile, OUT_PAD), lambda i: (i, 0)),   # bf16 score slab
            pl.BlockSpec((8, OUT_PAD), lambda i: (i, 0)),      # per-tile nll partial sums
        ),
        out_shape=(
            jax.ShapeDtypeStruct((n_pad, OUT_PAD), jnp.bfloat16),
            jax.ShapeDtypeStruct((num_tiles * 8, OUT_PAD), jnp.float32),
        ),
        compiler_params=pltpu.CompilerParams(
            dimension_semantics=("parallel",),                 # megacore split on v7x
            vmem_limit_bytes=32 * 1024 * 1024,                 # safe on v7x 64 MiB/TC
        ),
    )(x, lbl, *kernel_params)

    score = score_slab[:n, :NUM_CLASSES].astype(jnp.float32)
    loss = jnp.sum(nll_part[::8, 0]) / n                       # finish mean over true N only
    return {"score": score, "loss": loss}


def init_params(key):
    """nn.Linear-style init (uniform +-1/sqrt(fan_in)); logical shapes, W as (in, out)."""
    params = []
    for fan_in, fan_out in LAYER_SIZES:
        key, kw, kb = jax.random.split(key, 3)
        bound = 1.0 / (fan_in ** 0.5)
        w = jax.random.uniform(kw, (fan_in, fan_out), jnp.float32, -bound, bound)
        b = jax.random.uniform(kb, (fan_out,), jnp.float32, -bound, bound)
        params.append((w, b))
    return params


def pack_params_for_kernel(params):
    """Pad only fan_out to a 128 multiple (last layer 10 -> 128); keep fan_in exact
    (784 stays 784).  Weights bf16 MXU operands, biases f32 (1, out)."""
    packed = []
    for w, b in params:
        fan_in, fan_out = w.shape
        out_p = _round_up(fan_out, 128)
        wp = jnp.zeros((fan_in, out_p), jnp.float32).at[:, :fan_out].set(w)
        bp = jnp.zeros((1, out_p), jnp.float32).at[0, :fan_out].set(b)
        packed += [wp.astype(jnp.bfloat16), bp]
    return packed


def reference_forward(img, labels, params):
    """Pure-JAX reference with the same bf16-operand / f32-accumulate matmuls."""
    h = img.reshape(img.shape[0], -1).astype(jnp.float32)
    for i in range(4):
        w, b = params[i]
        h = jnp.maximum(jnp.dot(h.astype(jnp.bfloat16), w.astype(jnp.bfloat16),
                                preferred_element_type=jnp.float32) + b, 0.0)
    w, b = params[4]
    logits = jnp.dot(h.astype(jnp.bfloat16), w.astype(jnp.bfloat16),
                     preferred_element_type=jnp.float32) + b
    score = jax.nn.softmax(logits, axis=1)
    lse = jax.scipy.special.logsumexp(score, axis=1)
    picked = jnp.take_along_axis(score, labels[:, None].astype(jnp.int32), axis=1)[:, 0]
    return score, jnp.mean(lse - picked)


if __name__ == "__main__":
    key = jax.random.PRNGKey(0)
    k_img, k_lbl, k_par, k_img2, k_lbl2 = jax.random.split(key, 5)

    params = init_params(k_par)
    kernel_params = pack_params_for_kernel(params)

    # Small MNIST-like batch: NCHW (2, 1, 28, 28) -> flattened (2, 784)
    img = jax.random.normal(k_img, (2, 1, 28, 28), jnp.float32)
    labels = jax.random.randint(k_lbl, (2,), 0, NUM_CLASSES)
    out = mlp_forward(img, labels, kernel_params)
    jax.block_until_ready(out)

    ref_score, ref_loss = reference_forward(img, labels, params)
    assert jnp.allclose(out["score"], ref_score, atol=1e-2, rtol=1e-2), "score mismatch (small batch)"
    assert jnp.allclose(out["loss"], ref_loss, atol=1e-2, rtol=1e-2), "loss mismatch (small batch)"

    # Larger, non-multiple-of-tile batch: exercises the grid, resident weights,
    # even-step tile adjustment, and padded-row masking in the in-kernel loss sum.
    img2 = jax.random.normal(k_img2, (520, 1, 28, 28), jnp.float32)
    labels2 = jax.random.randint(k_lbl2, (520,), 0, NUM_CLASSES)
    out2 = mlp_forward(img2, labels2, kernel_params, tile_n=256)
    jax.block_until_ready(out2)

    ref_score2, ref_loss2 = reference_forward(img2, labels2, params)
    assert jnp.allclose(out2["score"], ref_score2, atol=1e-2, rtol=1e-2), "score mismatch (tiled batch)"
    assert jnp.allclose(out2["loss"], ref_loss2, atol=1e-2, rtol=1e-2), "loss mismatch (tiled batch)"

    print("KERNEL_OK")
</pallas_src>

<mosaic_0001>
module attributes {stable_mosaic.version = 11 : i64} {
  func.func @mlp_kernel(%arg0: i32, %arg1: memref<16x784xbf16, #tpu.memory_space<vmem>>, %arg2: memref<16x1xi32, #tpu.memory_space<vmem>>, %arg3: memref<784x512xbf16, #tpu.memory_space<vmem>>, %arg4: memref<1x512xf32, #tpu.memory_space<vmem>>, %arg5: memref<512x256xbf16, #tpu.memory_space<vmem>>, %arg6: memref<1x256xf32, #tpu.memory_space<vmem>>, %arg7: memref<256x256xbf16, #tpu.memory_space<vmem>>, %arg8: memref<1x256xf32, #tpu.memory_space<vmem>>, %arg9: memref<256x128xbf16, #tpu.memory_space<vmem>>, %arg10: memref<1x128xf32, #tpu.memory_space<vmem>>, %arg11: memref<128x128xbf16, #tpu.memory_space<vmem>>, %arg12: memref<1x128xf32, #tpu.memory_space<vmem>>, %arg13: memref<16x128xbf16, #tpu.memory_space<vmem>>, %arg14: memref<8x128xf32, #tpu.memory_space<vmem>>) attributes {dimension_semantics = [#tpu.dimension_semantics<parallel>], iteration_bounds = array<i64: 1>, scalar_prefetch = 0 : i64, scratch_operands = 0 : i64, tpu.core_type = #tpu.core_type<tc>, window_params = [{transform_indices = @transform_0, window_bounds = array<i64: 16, 784>}, {transform_indices = @transform_1, window_bounds = array<i64: 16, 1>}, {pipeline_mode = #tpu.pipeline_mode<synchronous>, transform_indices = @transform_2, window_bounds = array<i64: 784, 512>}, {pipeline_mode = #tpu.pipeline_mode<synchronous>, transform_indices = @transform_3, window_bounds = array<i64: 1, 512>}, {pipeline_mode = #tpu.pipeline_mode<synchronous>, transform_indices = @transform_4, window_bounds = array<i64: 512, 256>}, {pipeline_mode = #tpu.pipeline_mode<synchronous>, transform_indices = @transform_5, window_bounds = array<i64: 1, 256>}, {pipeline_mode = #tpu.pipeline_mode<synchronous>, transform_indices = @transform_6, window_bounds = array<i64: 256, 256>}, {pipeline_mode = #tpu.pipeline_mode<synchronous>, transform_indices = @transform_7, window_bounds = array<i64: 1, 256>}, {pipeline_mode = #tpu.pipeline_mode<synchronous>, transform_indices = @transform_8, window_bounds = array<i64: 256, 128>}, {pipeline_mode = #tpu.pipeline_mode<synchronous>, transform_indices = @transform_9, window_bounds = array<i64: 1, 128>}, {pipeline_mode = #tpu.pipeline_mode<synchronous>, transform_indices = @transform_10, window_bounds = array<i64: 128, 128>}, {pipeline_mode = #tpu.pipeline_mode<synchronous>, transform_indices = @transform_11, window_bounds = array<i64: 1, 128>}, {transform_indices = @transform_12, window_bounds = array<i64: 16, 128>}, {transform_indices = @transform_13, window_bounds = array<i64: 8, 128>}]} {
    %c0 = arith.constant 0 : index
    %c0_0 = arith.constant 0 : index
    %0 = vector.load %arg1[%c0, %c0_0] : memref<16x784xbf16, #tpu.memory_space<vmem>>, vector<16x784xbf16>
    %c0_1 = arith.constant 0 : index
    %c0_2 = arith.constant 0 : index
    %1 = vector.load %arg3[%c0_1, %c0_2] : memref<784x512xbf16, #tpu.memory_space<vmem>>, vector<784x512xbf16>
    %cst = arith.constant dense<0.000000e+00> : vector<16x512xf32>
    %2 = tpu.matmul %0, %1, %cst {dimension_numbers = #tpu.dot_dimension_numbers<[1], [0], [0], [1], [0, 0, 1, 1], [], []>} : vector<16x784xbf16>, vector<784x512xbf16>, vector<16x512xf32> -> vector<16x512xf32>
    %c0_3 = arith.constant 0 : index
    %c0_4 = arith.constant 0 : index
    %3 = vector.load %arg4[%c0_3, %c0_4] : memref<1x512xf32, #tpu.memory_space<vmem>>, vector<1x512xf32>
    %4 = vector.broadcast %3 : vector<1x512xf32> to vector<16x512xf32>
    %5 = arith.addf %2, %4 : vector<16x512xf32>
    %cst_5 = arith.constant 0.000000e+00 : f32
    %6 = vector.broadcast %cst_5 : f32 to vector<16x512xf32>
    %7 = arith.maximumf %5, %6 : vector<16x512xf32>
    %8 = arith.truncf %7 : vector<16x512xf32> to vector<16x512xbf16>
    %c0_6 = arith.constant 0 : index
    %c0_7 = arith.constant 0 : index
    %9 = vector.load %arg5[%c0_6, %c0_7] : memref<512x256xbf16, #tpu.memory_space<vmem>>, vector<512x256xbf16>
    %cst_8 = arith.constant dense<0.000000e+00> : vector<16x256xf32>
    %10 = tpu.matmul %8, %9, %cst_8 {dimension_numbers = #tpu.dot_dimension_numbers<[1], [0], [0], [1], [0, 0, 1, 1], [], []>} : vector<16x512xbf16>, vector<512x256xbf16>, vector<16x256xf32> -> vector<16x256xf32>
    %c0_9 = arith.constant 0 : index
    %c0_10 = arith.constant 0 : index
    %11 = vector.load %arg6[%c0_9, %c0_10] : memref<1x256xf32, #tpu.memory_space<vmem>>, vector<1x256xf32>
    %12 = vector.broadcast %11 : vector<1x256xf32> to vector<16x256xf32>
    %13 = arith.addf %10, %12 : vector<16x256xf32>
    %cst_11 = arith.constant 0.000000e+00 : f32
    %14 = vector.broadcast %cst_11 : f32 to vector<16x256xf32>
    %15 = arith.maximumf %13, %14 : vector<16x256xf32>
    %16 = arith.truncf %15 : vector<16x256xf32> to vector<16x256xbf16>
    %c0_12 = arith.constant 0 : index
    %c0_13 = arith.constant 0 : index
    %17 = vector.load %arg7[%c0_12, %c0_13] : memref<256x256xbf16, #tpu.memory_space<vmem>>, vector<256x256xbf16>
    %cst_14 = arith.constant dense<0.000000e+00> : vector<16x256xf32>
    %18 = tpu.matmul %16, %17, %cst_14 {dimension_numbers = #tpu.dot_dimension_numbers<[1], [0], [0], [1], [0, 0, 1, 1], [], []>} : vector<16x256xbf16>, vector<256x256xbf16>, vector<16x256xf32> -> vector<16x256xf32>
    %c0_15 = arith.constant 0 : index
    %c0_16 = arith.constant 0 : index
    %19 = vector.load %arg8[%c0_15, %c0_16] : memref<1x256xf32, #tpu.memory_space<vmem>>, vector<1x256xf32>
    %20 = vector.broadcast %19 : vector<1x256xf32> to vector<16x256xf32>
    %21 = arith.addf %18, %20 : vector<16x256xf32>
    %cst_17 = arith.constant 0.000000e+00 : f32
    %22 = vector.broadcast %cst_17 : f32 to vector<16x256xf32>
    %23 = arith.maximumf %21, %22 : vector<16x256xf32>
    %24 = arith.truncf %23 : vector<16x256xf32> to vector<16x256xbf16>
    %c0_18 = arith.constant 0 : index
    %c0_19 = arith.constant 0 : index
    %25 = vector.load %arg9[%c0_18, %c0_19] : memref<256x128xbf16, #tpu.memory_space<vmem>>, vector<256x128xbf16>
    %cst_20 = arith.constant dense<0.000000e+00> : vector<16x128xf32>
    %26 = tpu.matmul %24, %25, %cst_20 {dimension_numbers = #tpu.dot_dimension_numbers<[1], [0], [0], [1], [0, 0, 1, 1], [], []>} : vector<16x256xbf16>, vector<256x128xbf16>, vector<16x128xf32> -> vector<16x128xf32>
    %c0_21 = arith.constant 0 : index
    %c0_22 = arith.constant 0 : index
    %27 = vector.load %arg10[%c0_21, %c0_22] : memref<1x128xf32, #tpu.memory_space<vmem>>, vector<1x128xf32>
    %28 = vector.broadcast %27 : vector<1x128xf32> to vector<16x128xf32>
    %29 = arith.addf %26, %28 : vector<16x128xf32>
    %cst_23 = arith.constant 0.000000e+00 : f32
    %30 = vector.broadcast %cst_23 : f32 to vector<16x128xf32>
    %31 = arith.maximumf %29, %30 : vector<16x128xf32>
    %32 = arith.truncf %31 : vector<16x128xf32> to vector<16x128xbf16>
    %c0_24 = arith.constant 0 : index
    %c0_25 = arith.constant 0 : index
    %33 = vector.load %arg11[%c0_24, %c0_25] : memref<128x128xbf16, #tpu.memory_space<vmem>>, vector<128x128xbf16>
    %cst_26 = arith.constant dense<0.000000e+00> : vector<16x128xf32>
    %34 = tpu.matmul %32, %33, %cst_26 {dimension_numbers = #tpu.dot_dimension_numbers<[1], [0], [0], [1], [0, 0, 1, 1], [], []>} : vector<16x128xbf16>, vector<128x128xbf16>, vector<16x128xf32> -> vector<16x128xf32>
    %c0_27 = arith.constant 0 : index
    %c0_28 = arith.constant 0 : index
    %35 = vector.load %arg12[%c0_27, %c0_28] : memref<1x128xf32, #tpu.memory_space<vmem>>, vector<1x128xf32>
    %36 = vector.broadcast %35 : vector<1x128xf32> to vector<16x128xf32>
    %37 = arith.addf %34, %36 : vector<16x128xf32>
    %38 = tpu.iota {dimensions = array<i32: 1>} : vector<16x128xi32>
    %c10_i32 = arith.constant 10 : i32
    %39 = vector.broadcast %c10_i32 : i32 to vector<16x128xi32>
    %40 = arith.cmpi slt, %38, %39 : vector<16x128xi32>
    %cst_29 = arith.constant -1.000000e+30 : f32
    %41 = vector.broadcast %cst_29 : f32 to vector<16x128xf32>
    %42 = arith.select %40, %37, %41 : vector<16x128xi1>, vector<16x128xf32>
    %cst_30 = arith.constant dense<0xFF800000> : vector<16xf32>
    %43 = vector.multi_reduction <maximumf>, %42, %cst_30 [1] : vector<16x128xf32> to vector<16xf32>
    %44 = vector.shape_cast %43 : vector<16xf32> to vector<16x1xf32>
    %45 = vector.broadcast %44 : vector<16x1xf32> to vector<16x128xf32>
    %46 = arith.subf %42, %45 : vector<16x128xf32>
    %47 = math.exp %46 : vector<16x128xf32>
    %cst_31 = arith.constant dense<0.000000e+00> : vector<16xf32>
    %48 = vector.multi_reduction <add>, %47, %cst_31 [1] : vector<16x128xf32> to vector<16xf32>
    %49 = vector.shape_cast %48 : vector<16xf32> to vector<16x1xf32>
    %50 = tpu.reciprocal %49 {approx = true} : vector<16x1xf32> -> vector<16x1xf32>
    %51 = vector.broadcast %50 : vector<16x1xf32> to vector<16x128xf32>
    %52 = arith.mulf %47, %51 : vector<16x128xf32>
    %cst_32 = arith.constant -1.000000e+30 : f32
    %53 = vector.broadcast %cst_32 : f32 to vector<16x128xf32>
    %54 = arith.select %40, %52, %53 : vector<16x128xi1>, vector<16x128xf32>
    %cst_33 = arith.constant 1.000000e+00 : f32
    %55 = vector.broadcast %cst_33 : f32 to vector<16x128xf32>
    %56 = arith.subf %54, %55 : vector<16x128xf32>
    %57 = math.exp %56 : vector<16x128xf32>
    %cst_34 = arith.constant dense<0.000000e+00> : vector<16xf32>
    %58 = vector.multi_reduction <add>, %57, %cst_34 [1] : vector<16x128xf32> to vector<16xf32>
    %59 = vector.shape_cast %58 : vector<16xf32> to vector<16x1xf32>
    %60 = math.log %59 : vector<16x1xf32>
    %cst_35 = arith.constant 1.000000e+00 : f32
    %61 = vector.broadcast %cst_35 : f32 to vector<16x1xf32>
    %62 = arith.addf %60, %61 : vector<16x1xf32>
    %c0_36 = arith.constant 0 : index
    %c0_37 = arith.constant 0 : index
    %63 = vector.load %arg2[%c0_36, %c0_37] : memref<16x1xi32, #tpu.memory_space<vmem>>, vector<16x1xi32>
    %64 = vector.broadcast %63 : vector<16x1xi32> to vector<16x128xi32>
    %65 = arith.cmpi eq, %38, %64 : vector<16x128xi32>
    %66 = arith.extui %65 : vector<16x128xi1> to vector<16x128xi32>
    %67 = arith.sitofp %66 : vector<16x128xi32> to vector<16x128xf32>
    %68 = arith.mulf %67, %52 : vector<16x128xf32>
    %cst_38 = arith.constant dense<0.000000e+00> : vector<16xf32>
    %69 = vector.multi_reduction <add>, %68, %cst_38 [1] : vector<16x128xf32> to vector<16xf32>
    %70 = vector.shape_cast %69 : vector<16xf32> to vector<16x1xf32>
    %71 = arith.subf %62, %70 : vector<16x1xf32>
    %c16_i32 = arith.constant 16 : i32
    %72 = arith.muli %arg0, %c16_i32 : i32
    %73 = tpu.iota {dimensions = array<i32: 0>} : vector<16x1xi32>
    %74 = vector.broadcast %72 : i32 to vector<16x1xi32>
    %75 = arith.addi %74, %73 : vector<16x1xi32>
    %c2_i32 = arith.constant 2 : i32
    %76 = vector.broadcast %c2_i32 : i32 to vector<16x1xi32>
    %77 = arith.cmpi slt, %75, %76 : vector<16x1xi32>
    %cst_39 = arith.constant 0.000000e+00 : f32
    %78 = vector.broadcast %cst_39 : f32 to vector<16x1xf32>
    %79 = arith.select %77, %71, %78 : vector<16x1xi1>, vector<16x1xf32>
    %cst_40 = arith.constant dense<0.000000e+00> : vector<1xf32>
    %80 = vector.multi_reduction <add>, %79, %cst_40 [0] : vector<16x1xf32> to vector<1xf32>
    %81 = vector.shape_cast %80 : vector<1xf32> to vector<1x1xf32>
    %82 = arith.truncf %52 : vector<16x128xf32> to vector<16x128xbf16>
    %c0_41 = arith.constant 0 : index
    %c0_42 = arith.constant 0 : index
    %83 = vector.load %arg13[%c0_41, %c0_42] : memref<16x128xbf16, #tpu.memory_space<vmem>>, vector<16x128xbf16>
    tpu.vector_store %arg13[%c0_41, %c0_42], %82 {strides = array<i32>} : memref<16x128xbf16, #tpu.memory_space<vmem>>, vector<16x128xbf16>,
    %84 = vector.shape_cast %81 : vector<1x1xf32> to vector<1x1xf32>
    %85 = vector.broadcast %84 : vector<1x1xf32> to vector<8x128xf32>
    %c0_43 = arith.constant 0 : index
    %c0_44 = arith.constant 0 : index
    %86 = vector.load %arg14[%c0_43, %c0_44] : memref<8x128xf32, #tpu.memory_space<vmem>>, vector<8x128xf32>
    tpu.vector_store %arg14[%c0_43, %c0_44], %85 {strides = array<i32>} : memref<8x128xf32, #tpu.memory_space<vmem>>, vector<8x128xf32>,
    return
  }
  func.func @transform_0(%arg0: i32) -> (i32, i32) {
    %c0_i32 = arith.constant 0 : i32
    %c0_i32_0 = arith.constant 0 : i32
    return %arg0, %c0_i32 : i32, i32
  }
  func.func @transform_1(%arg0: i32) -> (i32, i32) {
    %c0_i32 = arith.constant 0 : i32
    %c0_i32_0 = arith.constant 0 : i32
    return %arg0, %c0_i32 : i32, i32
  }
  func.func @transform_2(%arg0: i32) -> (i32, i32) {
    %c0_i32 = arith.constant 0 : i32
    %c0_i32_0 = arith.constant 0 : i32
    %c0_i32_1 = arith.constant 0 : i32
    return %c0_i32, %c0_i32_0 : i32, i32
  }
  func.func @transform_3(%arg0: i32) -> (i32, i32) {
    %c0_i32 = arith.constant 0 : i32
    %c0_i32_0 = arith.constant 0 : i32
    %c0_i32_1 = arith.constant 0 : i32
    return %c0_i32, %c0_i32_0 : i32, i32
  }
  func.func @transform_4(%arg0: i32) -> (i32, i32) {
    %c0_i32 = arith.constant 0 : i32
    %c0_i32_0 = arith.constant 0 : i32
    %c0_i32_1 = arith.constant 0 : i32
    return %c0_i32, %c0_i32_0 : i32, i32
  }
  func.func @transform_5(%arg0: i32) -> (i32, i32) {
    %c0_i32 = arith.constant 0 : i32
    %c0_i32_0 = arith.constant 0 : i32
    %c0_i32_1 = arith.constant 0 : i32
    return %c0_i32, %c0_i32_0 : i32, i32
  }
  func.func @transform_6(%arg0: i32) -> (i32, i32) {
    %c0_i32 = arith.constant 0 : i32
    %c0_i32_0 = arith.constant 0 : i32
    %c0_i32_1 = arith.constant 0 : i32
    return %c0_i32, %c0_i32_0 : i32, i32
  }
  func.func @transform_7(%arg0: i32) -> (i32, i32) {
    %c0_i32 = arith.constant 0 : i32
    %c0_i32_0 = arith.constant 0 : i32
    %c0_i32_1 = arith.constant 0 : i32
    return %c0_i32, %c0_i32_0 : i32, i32
  }
  func.func @transform_8(%arg0: i32) -> (i32, i32) {
    %c0_i32 = arith.constant 0 : i32
    %c0_i32_0 = arith.constant 0 : i32
    %c0_i32_1 = arith.constant 0 : i32
    return %c0_i32, %c0_i32_0 : i32, i32
  }
  func.func @transform_9(%arg0: i32) -> (i32, i32) {
    %c0_i32 = arith.constant 0 : i32
    %c0_i32_0 = arith.constant 0 : i32
    %c0_i32_1 = arith.constant 0 : i32
    return %c0_i32, %c0_i32_0 : i32, i32
  }
  func.func @transform_10(%arg0: i32) -> (i32, i32) {
    %c0_i32 = arith.constant 0 : i32
    %c0_i32_0 = arith.constant 0 : i32
    %c0_i32_1 = arith.constant 0 : i32
    return %c0_i32, %c0_i32_0 : i32, i32
  }
  func.func @transform_11(%arg0: i32) -> (i32, i32) {
    %c0_i32 = arith.constant 0 : i32
    %c0_i32_0 = arith.constant 0 : i32
    %c0_i32_1 = arith.constant 0 : i32
    return %c0_i32, %c0_i32_0 : i32, i32
  }
  func.func @transform_12(%arg0: i32) -> (i32, i32) {
    %c0_i32 = arith.constant 0 : i32
    %c0_i32_0 = arith.constant 0 : i32
    return %arg0, %c0_i32 : i32, i32
  }
  func.func @transform_13(%arg0: i32) -> (i32, i32) {
    %c0_i32 = arith.constant 0 : i32
    %c0_i32_0 = arith.constant 0 : i32
    return %arg0, %c0_i32 : i32, i32
  }
}

</mosaic_0001>

<llo_original>
// kernel: tpu_custom_call.1
$region0: #{tpu_custom_call.1}
  #allocation0 [shape = 'u32[]', space=smem, size = 0x4, offset = 0x4, fixed_abs, tag = 'smem constant byte address 0x4 - core index']
  #allocation1 [shape = 'u32[144,128]{1,0:T(1,128)}', space=vmem, size = 0x12000, scoped, tag = 'internal scratch']
  %s0 = inlined_call_operand.hbm [shape: bf16[16,784], index: 0, kind: input, shape index: {}]
  %s1 = inlined_call_operand.vmem [shape: s32[16,1], index: 1, kind: input, shape index: {}]
  %s2 = inlined_call_operand.hbm [shape: bf16[784,512], index: 2, kind: input, shape index: {}]
  %s3 = inlined_call_operand.vmem [shape: f32[1,512], index: 3, kind: input, shape index: {}]
  %s4 = inlined_call_operand.hbm [shape: bf16[512,256], index: 4, kind: input, shape index: {}]
  %s5 = inlined_call_operand.vmem [shape: f32[1,256], index: 5, kind: input, shape index: {}]
  %s6 = inlined_call_operand.hbm [shape: bf16[256,256], index: 6, kind: input, shape index: {}]
  %s7 = inlined_call_operand.vmem [shape: f32[1,256], index: 7, kind: input, shape index: {}]
  %s8 = inlined_call_operand.hbm [shape: bf16[256,128], index: 8, kind: input, shape index: {}]
  %s9 = inlined_call_operand.vmem [shape: f32[1,128], index: 9, kind: input, shape index: {}]
  %s10 = inlined_call_operand.hbm [shape: bf16[128,128], index: 10, kind: input, shape index: {}]
  %s11 = inlined_call_operand.vmem [shape: f32[1,128], index: 11, kind: input, shape index: {}]
  %s12 = inlined_call_operand.hbm [shape: bf16[16,128], index: 12, kind: output, shape index: {0}]
  %s13 = inlined_call_operand.hbm [shape: f32[8,128], index: 13, kind: output, shape index: {1}]
  %14 = xla_tuple %s12, %s13
  %s15 = sld [smem:[#allocation0]]
  $region90: #{tpu_custom_call.1} parent=0
    _
  %s17 = ssub.s32 1, %s15
  %s18 = scalar_select 0, %s17, %s15
  $region1: #{tpu_custom_call.1} parent=0
    #allocation2 [shape = 'u8[28672]{0}', space=vmem, size = 0x7000, scoped, tag = 'input window, operand 0, single buffered']
    #allocation3 [shape = 's32[1]{0}', space=sflag, size = 0x4, scoped, tag = 'scoped memory for tpu_custom_call.1']
    #allocation4 [shape = 's32[1]{0}', space=sflag, size = 0x4, scoped, tag = 'scoped memory for tpu_custom_call.1']
    #allocation5 [shape = 'u8[802816]{0}', space=vmem, size = 0xc4000, scoped, tag = 'input window, operand 2, single buffered']
    #allocation6 [shape = 's32[1]{0}', space=sflag, size = 0x4, scoped, tag = 'scoped memory for tpu_custom_call.1']
    #allocation7 [shape = 'u8[262144]{0}', space=vmem, size = 0x40000, scoped, tag = 'input window, operand 4, single buffered']
    #allocation8 [shape = 'u8[131072]{0}', space=vmem, size = 0x20000, scoped, tag = 'input window, operand 6, single buffered']
    #allocation9 [shape = 's32[1]{0}', space=sflag, size = 0x4, scoped, tag = 'scoped memory for tpu_custom_call.1']
    #allocation10 [shape = 'u8[65536]{0}', space=vmem, size = 0x10000, scoped, tag = 'input window, operand 8, single buffered']
    #allocation11 [shape = 'u8[32768]{0}', space=vmem, size = 0x8000, scoped, tag = 'input window, operand 10, single buffered']
    #allocation12 [shape = 's32[1]{0}', space=sflag, size = 0x4, scoped, tag = 'scoped memory for tpu_custom_call.1']
    #allocation13 [shape = 'u8[4096]{0}', space=vmem, size = 0x1000, scoped, tag = 'output window, operand 0, single buffered']
    #allocation14 [shape = 'u8[4096]{0}', space=vmem, size = 0x1000, scoped, tag = 'output window, operand 1, single buffered']
    #allocation15 [shape = 's32[1]{0}', space=sflag, size = 0x4, scoped, tag = 'scoped memory for tpu_custom_call.1']
    %19 = vsyncpa [#allocation3], 0
    %20 = vsyncpa [#allocation6], 0
    %21 = vsyncpa [#allocation9], 0
    %22 = vsyncpa [#allocation12], 0
    %23 = vsyncpa [#allocation4], 0
    %24 = vsyncpa [#allocation15], 0
    // Predicated region
    $region2: #{tpu_custom_call.1} parent=1 // pred_check
      _
    $region3: #{tpu_custom_call.1} parent=1 // pred_check_branch
      %26 = sbr.rel (0) target = $region5
    $region4: #{tpu_custom_call.1} parent=1 // pred_region
      %s28 = ssub.s32 896, 896
      %29 = vsyncadd [#allocation3], %s28
      %s30 = sshll.u32 [#allocation2], 4
      %s31 = int_to_ptr.vmem [resolvable:$true] %s30
      %36 = dma.hbm_to_vmem [thread:$0]  %s0, 896, %s31, [#allocation3], 448, 448, 28
    $region5: #{tpu_custom_call.1} parent=1 // pred_fallthru
      _
    // Predicated region
    $region6: #{tpu_custom_call.1} parent=1 // pred_check
      _
    $region7: #{tpu_custom_call.1} parent=1 // pred_check_branch
      %38 = sbr.rel (0) target = $region9
    $region8: #{tpu_custom_call.1} parent=1 // pred_region
      _
    $region9: #{tpu_custom_call.1} parent=1 // pred_fallthru
      _
    // Predicated region
    $region10: #{tpu_custom_call.1} parent=1 // pred_check
      _
    $region11: #{tpu_custom_call.1} parent=1 // pred_check_branch
      %40 = sbr.rel (0) target = $region13
    $region12: #{tpu_custom_call.1} parent=1 // pred_region
      %s42 = ssub.s32 25088, 25088
      %43 = vsyncadd [#allocation6], %s42
      %s44 = sshll.u32 [#allocation5], 4
      %s45 = int_to_ptr.vmem [resolvable:$true] %s44
      %50 = dma.hbm_to_vmem [thread:$0]  %s2, 25088, %s45, [#allocation6], 256, 256, 16
    $region13: #{tpu_custom_call.1} parent=1 // pred_fallthru
      _
    // Predicated region
    $region14: #{tpu_custom_call.1} parent=1 // pred_check
      _
    $region15: #{tpu_custom_call.1} parent=1 // pred_check_branch
      %52 = sbr.rel (0) target = $region17
    $region16: #{tpu_custom_call.1} parent=1 // pred_region
      _
    $region17: #{tpu_custom_call.1} parent=1 // pred_fallthru
      _
    // Predicated region
    $region18: #{tpu_custom_call.1} parent=1 // pred_check
      _
    $region19: #{tpu_custom_call.1} parent=1 // pred_check_branch
      %54 = sbr.rel (0) target = $region21
    $region20: #{tpu_custom_call.1} parent=1 // pred_region
      %s56 = ssub.s32 8192, 8192
      %57 = vsyncadd [#allocation6], %s56
      %s58 = sshll.u32 [#allocation7], 4
      %s59 = int_to_ptr.vmem [resolvable:$true] %s58
      %64 = dma.hbm_to_vmem [thread:$0]  %s4, 8192, %s59, [#allocation6], 128, 128, 8
    $region21: #{tpu_custom_call.1} parent=1 // pred_fallthru
      _
    // Predicated region
    $region22: #{tpu_custom_call.1} parent=1 // pred_check
      _
    $region23: #{tpu_custom_call.1} parent=1 // pred_check_branch
      %66 = sbr.rel (0) target = $region25
    $region24: #{tpu_custom_call.1} parent=1 // pred_region
      _
    $region25: #{tpu_custom_call.1} parent=1 // pred_fallthru
      _
    // Predicated region
    $region26: #{tpu_custom_call.1} parent=1 // pred_check
      _
    $region27: #{tpu_custom_call.1} parent=1 // pred_check_branch
      %68 = sbr.rel (0) target = $region29
    $region28: #{tpu_custom_call.1} parent=1 // pred_region
      %s70 = ssub.s32 4096, 4096
      %71 = vsyncadd [#allocation9], %s70
      %s72 = sshll.u32 [#allocation8], 4
      %s73 = int_to_ptr.vmem [resolvable:$true] %s72
      %78 = dma.hbm_to_vmem [thread:$0]  %s6, 4096, %s73, [#allocation9], 128, 128, 8
    $region29: #{tpu_custom_call.1} parent=1 // pred_fallthru
      _
    // Predicated region
    $region30: #{tpu_custom_call.1} parent=1 // pred_check
      _
    $region31: #{tpu_custom_call.1} parent=1 // pred_check_branch
      %80 = sbr.rel (0) target = $region33
    $region32: #{tpu_custom_call.1} parent=1 // pred_region
      _
    $region33: #{tpu_custom_call.1} parent=1 // pred_fallthru
      _
    // Predicated region
    $region34: #{tpu_custom_call.1} parent=1 // pred_check
      _
    $region35: #{tpu_custom_call.1} parent=1 // pred_check_branch
      %82 = sbr.rel (0) target = $region37
    $region36: #{tpu_custom_call.1} parent=1 // pred_region
      %s84 = ssub.s32 2048, 2048
      %85 = vsyncadd [#allocation9], %s84
      %s86 = sshll.u32 [#allocation10], 4
      %s87 = int_to_ptr.vmem [resolvable:$true] %s86
      %92 = dma.hbm_to_vmem [thread:$0]  %s8, 2048, %s87, [#allocation9], 64, 64, 4
    $region37: #{tpu_custom_call.1} parent=1 // pred_fallthru
      _
    // Predicated region
    $region38: #{tpu_custom_call.1} parent=1 // pred_check
      _
    $region39: #{tpu_custom_call.1} parent=1 // pred_check_branch
      %94 = sbr.rel (0) target = $region41
    $region40: #{tpu_custom_call.1} parent=1 // pred_region
      _
    $region41: #{tpu_custom_call.1} parent=1 // pred_fallthru
      _
    // Predicated region
    $region42: #{tpu_custom_call.1} parent=1 // pred_check
      _
    $region43: #{tpu_custom_call.1} parent=1 // pred_check_branch
      %96 = sbr.rel (0) target = $region45
    $region44: #{tpu_custom_call.1} parent=1 // pred_region
      %s98 = ssub.s32 1024, 1024
      %99 = vsyncadd [#allocation12], %s98
      %s100 = sshll.u32 [#allocation11], 4
      %s101 = int_to_ptr.vmem [resolvable:$true] %s100
      %106 = dma.hbm_to_vmem [thread:$0]  %s10, 1024, %s101, [#allocation12], 64, 64, 4
    $region45: #{tpu_custom_call.1} parent=1 // pred_fallthru
      _
    // Predicated region
    $region46: #{tpu_custom_call.1} parent=1 // pred_check
      _
    $region47: #{tpu_custom_call.1} parent=1 // pred_check_branch
      %108 = sbr.rel (0) target = $region49
    $region48: #{tpu_custom_call.1} parent=1 // pred_region
      _
    $region49: #{tpu_custom_call.1} parent=1 // pred_fallthru
      _
    // Predicated region
    $region50: #{tpu_custom_call.1} parent=1 // pred_check
      _
    $region51: #{tpu_custom_call.1} parent=1 // pred_check_branch
      %110 = sbr.rel (0) target = $region53
    $region52: #{tpu_custom_call.1} parent=1 // pred_region
      %111 = dma.done [#allocation3], 896
    $region53: #{tpu_custom_call.1} parent=1 // pred_fallthru
      _
    // Predicated region
    $region54: #{tpu_custom_call.1} parent=1 // pred_check
      _
    $region55: #{tpu_custom_call.1} parent=1 // pred_check_branch
      %113 = sbr.rel (0) target = $region57
    $region56: #{tpu_custom_call.1} parent=1 // pred_region
      %114 = dma.done [#allocation6], 25088
    $region57: #{tpu_custom_call.1} parent=1 // pred_fallthru
      _
    // Predicated region
    $region58: #{tpu_custom_call.1} parent=1 // pred_check
      _
    $region59: #{tpu_custom_call.1} parent=1 // pred_check_branch
      %116 = sbr.rel (0) target = $region61
    $region60: #{tpu_custom_call.1} parent=1 // pred_region
      %117 = dma.done [#allocation6], 8192
    $region61: #{tpu_custom_call.1} parent=1 // pred_fallthru
      _
    // Predicated region
    $region62: #{tpu_custom_call.1} parent=1 // pred_check
      _
    $region63: #{tpu_custom_call.1} parent=1 // pred_check_branch
      %119 = sbr.rel (0) target = $region65
    $region64: #{tpu_custom_call.1} parent=1 // pred_region
      %120 = dma.done [#allocation9], 4096
    $region65: #{tpu_custom_call.1} parent=1 // pred_fallthru
      _
    // Predicated region
    $region66: #{tpu_custom_call.1} parent=1 // pred_check
      _
    $region67: #{tpu_custom_call.1} parent=1 // pred_check_branch
      %122 = sbr.rel (0) target = $region69
    $region68: #{tpu_custom_call.1} parent=1 // pred_region
      %123 = dma.done [#allocation9], 2048
    $region69: #{tpu_custom_call.1} parent=1 // pred_fallthru
      _
    // Predicated region
    $region70: #{tpu_custom_call.1} parent=1 // pred_check
      _
    $region71: #{tpu_custom_call.1} parent=1 // pred_check_branch
      %125 = sbr.rel (0) target = $region73
    $region72: #{tpu_custom_call.1} parent=1 // pred_region
      %126 = dma.done [#allocation12], 1024
    $region73: #{tpu_custom_call.1} parent=1 // pred_fallthru
      _
    %v128 = vld [vmem:[#allocation2] sm:$0xff]
    %v129 = vld [vmem:[#allocation2 + $0x8] sm:$0xff]
    %v130 = vld [vmem:[#allocation2 + $0x10] sm:$0xff]
    %v131 = vld [vmem:[#allocation2 + $0x18] sm:$0xf]
    %v132 = vld [vmem:[#allocation2 + $0x1c] sm:$0xff]
    %v133 = vld [vmem:[#allocation2 + $0x24] sm:$0xff]
    %v134 = vld [vmem:[#allocation2 + $0x2c] sm:$0xff]
    %v135 = vld [vmem:[#allocation2 + $0x34] sm:$0xf]
    %v136 = vld [vmem:[#allocation5] sm:$0xff]
    %v137 = vld [vmem:[#allocation5 + $0x8] sm:$0xff]
    %v138 = vld [vmem:[#allocation5 + $0x10] sm:$0xff]
    %v139 = vld [vmem:[#allocation5 + $0x18] sm:$0xff]
    %v140 = vld [vmem:[#allocation5 + $0x20] sm:$0xff]
    %v141 = vld [vmem:[#allocation5 + $0x28] sm:$0xff]
    %v142 = vld [vmem:[#allocation5 + $0x30] sm:$0xff]
    %v143 = vld [vmem:[#allocation5 + $0x38] sm:$0xff]
    %v144 = vld [vmem:[#allocation5 + $0x40] sm:$0xff]
    %v145 = vld [vmem:[#allocation5 + $0x48] sm:$0xff]
    %v146 = vld [vmem:[#allocation5 + $0x50] sm:$0xff]
    %v147 = vld [vmem:[#allocation5 + $0x58] sm:$0xff]
    %v148 = vld [vmem:[#allocation5 + $0x60] sm:$0xff]
    %v149 = vld [vmem:[#allocation5 + $0x68] sm:$0xff]
    %v150 = vld [vmem:[#allocation5 + $0x70] sm:$0xff]
    %v151 = vld [vmem:[#allocation5 + $0x78] sm:$0xff]
    %v152 = vld [vmem:[#allocation5 + $0x80] sm:$0xff]
    %v153 = vld [vmem:[#allocation5 + $0x88] sm:$0xff]
    %v154 = vld [vmem:[#allocation5 + $0x90] sm:$0xff]
    %v155 = vld [vmem:[#allocation5 + $0x98] sm:$0xff]
    %v156 = vld [vmem:[#allocation5 + $0xa0] sm:$0xff]
    %v157 = vld [vmem:[#allocation5 + $0xa8] sm:$0xff]
    %v158 = vld [vmem:[#allocation5 + $0xb0] sm:$0xff]
    %v159 = vld [vmem:[#allocation5 + $0xb8] sm:$0xff]
    %v160 = vld [vmem:[#allocation5 + $0xc0] sm:$0xff]
    %v161 = vld [vmem:[#allocation5 + $0xc8] sm:$0xff]
    %v162 = vld [vmem:[#allocation5 + $0xd0] sm:$0xff]
    %v163 = vld [vmem:[#allocation5 + $0xd8] sm:$0xff]
    %v164 = vld [vmem:[#allocation5 + $0xe0] sm:$0xff]
    %v165 = vld [vmem:[#allocation5 + $0xe8] sm:$0xff]
    %v166 = vld [vmem:[#allocation5 + $0xf0] sm:$0xff]
    %v167 = vld [vmem:[#allocation5 + $0xf8] sm:$0xff]
    %v168 = vld [vmem:[#allocation5 + $0x100] sm:$0xff]
    %v169 = vld [vmem:[#allocation5 + $0x108] sm:$0xff]
    %v170 = vld [vmem:[#allocation5 + $0x110] sm:$0xff]
    %v171 = vld [vmem:[#allocation5 + $0x118] sm:$0xff]
    %v172 = vld [vmem:[#allocation5 + $0x120] sm:$0xff]
    %v173 = vld [vmem:[#allocation5 + $0x128] sm:$0xff]
    %v174 = vld [vmem:[#allocation5 + $0x130] sm:$0xff]
    %v175 = vld [vmem:[#allocation5 + $0x138] sm:$0xff]
    %v176 = vld [vmem:[#allocation5 + $0x140] sm:$0xff]
    %v177 = vld [vmem:[#allocation5 + $0x148] sm:$0xff]
    %v178 = vld [vmem:[#allocation5 + $0x150] sm:$0xff]
    %v179 = vld [vmem:[#allocation5 + $0x158] sm:$0xff]
    %v180 = vld [vmem:[#allocation5 + $0x160] sm:$0xff]
    %v181 = vld [vmem:[#allocation5 + $0x168] sm:$0xff]
    %v182 = vld [vmem:[#allocation5 + $0x170] sm:$0xff]
    %v183 = vld [vmem:[#allocation5 + $0x178] sm:$0xff]
    %v184 = vld [vmem:[#allocation5 + $0x180] sm:$0xff]
    %v185 = vld [vmem:[#allocation5 + $0x188] sm:$0xff]
    %v186 = vld [vmem:[#allocation5 + $0x190] sm:$0xff]
    %v187 = vld [vmem:[#allocation5 + $0x198] sm:$0xff]
    %v188 = vld [vmem:[#allocation5 + $0x1a0] sm:$0xff]
    %v189 = vld [vmem:[#allocation5 + $0x1a8] sm:$0xff]
    %v190 = vld [vmem:[#allocation5 + $0x1b0] sm:$0xff]
    %v191 = vld [vmem:[#allocation5 + $0x1b8] sm:$0xff]
    %v192 = vld [vmem:[#allocation5 + $0x1c0] sm:$0xff]
    %v193 = vld [vmem:[#allocation5 + $0x1c8] sm:$0xff]
    %v194 = vld [vmem:[#allocation5 + $0x1d0] sm:$0xff]
    %v195 = vld [vmem:[#allocation5 + $0x1d8] sm:$0xff]
    %v196 = vld [vmem:[#allocation5 + $0x1e0] sm:$0xff]
    %v197 = vld [vmem:[#allocation5 + $0x1e8] sm:$0xff]
    %v198 = vld [vmem:[#allocation5 + $0x1f0] sm:$0xff]
    %v199 = vld [vmem:[#allocation5 + $0x1f8] sm:$0xff]
    %v200 = vld [vmem:[#allocation5 + $0x200] sm:$0xff]
    %v201 = vld [vmem:[#allocation5 + $0x208] sm:$0xff]
    %v202 = vld [vmem:[#allocation5 + $0x210] sm:$0xff]
    %v203 = vld [vmem:[#allocation5 + $0x218] sm:$0xff]
    %v204 = vld [vmem:[#allocation5 + $0x220] sm:$0xff]
    %v205 = vld [vmem:[#allocation5 + $0x228] sm:$0xff]
    %v206 = vld [vmem:[#allocation5 + $0x230] sm:$0xff]
    %v207 = vld [vmem:[#allocation5 + $0x238] sm:$0xff]
    %v208 = vld [vmem:[#allocation5 + $0x240] sm:$0xff]
    %v209 = vld [vmem:[#allocation5 + $0x248] sm:$0xff]
    %v210 = vld [vmem:[#allocation5 + $0x250] sm:$0xff]
    %v211 = vld [vmem:[#allocation5 + $0x258] sm:$0xff]
    %v212 = vld [vmem:[#allocation5 + $0x260] sm:$0xff]
    %v213 = vld [vmem:[#allocation5 + $0x268] sm:$0xff]
    %v214 = vld [vmem:[#allocation5 + $0x270] sm:$0xff]
    %v215 = vld [vmem:[#allocation5 + $0x278] sm:$0xff]
    %v216 = vld [vmem:[#allocation5 + $0x280] sm:$0xff]
    %v217 = vld [vmem:[#allocation5 + $0x288] sm:$0xff]
    %v218 = vld [vmem:[#allocation5 + $0x290] sm:$0xff]
    %v219 = vld [vmem:[#allocation5 + $0x298] sm:$0xff]
    %v220 = vld [vmem:[#allocation5 + $0x2a0] sm:$0xff]
    %v221 = vld [vmem:[#allocation5 + $0x2a8] sm:$0xff]
    %v222 = vld [vmem:[#allocation5 + $0x2b0] sm:$0xff]
    %v223 = vld [vmem:[#allocation5 + $0x2b8] sm:$0xff]
    %v224 = vld [vmem:[#allocation5 + $0x2c0] sm:$0xff]
    %v225 = vld [vmem:[#allocation5 + $0x2c8] sm:$0xff]
    %v226 = vld [vmem:[#allocation5 + $0x2d0] sm:$0xff]
    %v227 = vld [vmem:[#allocation5 + $0x2d8] sm:$0xff]
    %v228 = vld [vmem:[#allocation5 + $0x2e0] sm:$0xff]
    %v229 = vld [vmem:[#allocation5 + $0x2e8] sm:$0xff]
    %v230 = vld [vmem:[#allocation5 + $0x2f0] sm:$0xff]
    %v231 = vld [vmem:[#allocation5 + $0x2f8] sm:$0xff]
    %v232 = vld [vmem:[#allocation5 + $0x300] sm:$0xff]
    %v233 = vld [vmem:[#allocation5 + $0x308] sm:$0xff]
    %v234 = vld [vmem:[#allocation5 + $0x310] sm:$0xff]
    %v235 = vld [vmem:[#allocation5 + $0x318] sm:$0xff]
    %v236 = vld [vmem:[#allocation5 + $0x320] sm:$0xff]
    %v237 = vld [vmem:[#allocation5 + $0x328] sm:$0xff]
    %v238 = vld [vmem:[#allocation5 + $0x330] sm:$0xff]
    %v239 = vld [vmem:[#allocation5 + $0x338] sm:$0xff]
    %v240 = vld [vmem:[#allocation5 + $0x340] sm:$0xff]
    %v241 = vld [vmem:[#allocation5 + $0x348] sm:$0xff]
    %v242 = vld [vmem:[#allocation5 + $0x350] sm:$0xff]
    %v243 = vld [vmem:[#allocation5 + $0x358] sm:$0xff]
    %v244 = vld [vmem:[#allocation5 + $0x360] sm:$0xff]
    %v245 = vld [vmem:[#allocation5 + $0x368] sm:$0xff]
    %v246 = vld [vmem:[#allocation5 + $0x370] sm:$0xff]
    %v247 = vld [vmem:[#allocation5 + $0x378] sm:$0xff]
    %v248 = vld [vmem:[#allocation5 + $0x380] sm:$0xff]
    %v249 = vld [vmem:[#allocation5 + $0x388] sm:$0xff]
    %v250 = vld [vmem:[#allocation5 + $0x390] sm:$0xff]
    %v251 = vld [vmem:[#allocation5 + $0x398] sm:$0xff]
    %v252 = vld [vmem:[#allocation5 + $0x3a0] sm:$0xff]
    %v253 = vld [vmem:[#allocation5 + $0x3a8] sm:$0xff]
    %v254 = vld [vmem:[#allocation5 + $0x3b0] sm:$0xff]
    %v255 = vld [vmem:[#allocation5 + $0x3b8] sm:$0xff]
    %v256 = vld [vmem:[#allocation5 + $0x3c0] sm:$0xff]
    %v257 = vld [vmem:[#allocation5 + $0x3c8] sm:$0xff]
    %v258 = vld [vmem:[#allocation5 + $0x3d0] sm:$0xff]
    %v259 = vld [vmem:[#allocation5 + $0x3d8] sm:$0xff]
    %v260 = vld [vmem:[#allocation5 + $0x3e0] sm:$0xff]
    %v261 = vld [vmem:[#allocation5 + $0x3e8] sm:$0xff]
    %v262 = vld [vmem:[#allocation5 + $0x3f0] sm:$0xff]
    %v263 = vld [vmem:[#allocation5 + $0x3f8] sm:$0xff]
    %v264 = vld [vmem:[#allocation5 + $0x400] sm:$0xff]
    %v265 = vld [vmem:[#allocation5 + $0x408] sm:$0xff]
    %v266 = vld [vmem:[#allocation5 + $0x410] sm:$0xff]
    %v267 = vld [vmem:[#allocation5 + $0x418] sm:$0xff]
    %v268 = vld [vmem:[#allocation5 + $0x420] sm:$0xff]
    %v269 = vld [vmem:[#allocation5 + $0x428] sm:$0xff]
    %v270 = vld [vmem:[#allocation5 + $0x430] sm:$0xff]
    %v271 = vld [vmem:[#allocation5 + $0x438] sm:$0xff]
    %v272 = vld [vmem:[#allocation5 + $0x440] sm:$0xff]
    %v273 = vld [vmem:[#allocation5 + $0x448] sm:$0xff]
    %v274 = vld [vmem:[#allocation5 + $0x450] sm:$0xff]
    %v275 = vld [vmem:[#allocation5 + $0x458] sm:$0xff]
    %v276 = vld [vmem:[#allocation5 + $0x460] sm:$0xff]
    %v277 = vld [vmem:[#allocation5 + $0x468] sm:$0xff]
    %v278 = vld [vmem:[#allocation5 + $0x470] sm:$0xff]
    %v279 = vld [vmem:[#allocation5 + $0x478] sm:$0xff]
    %v280 = vld [vmem:[#allocation5 + $0x480] sm:$0xff]
    %v281 = vld [vmem:[#allocation5 + $0x488] sm:$0xff]
    %v282 = vld [vmem:[#allocation5 + $0x490] sm:$0xff]
    %v283 = vld [vmem:[#allocation5 + $0x498] sm:$0xff]
    %v284 = vld [vmem:[#allocation5 + $0x4a0] sm:$0xff]
    %v285 = vld [vmem:[#allocation5 + $0x4a8] sm:$0xff]
    %v286 = vld [vmem:[#allocation5 + $0x4b0] sm:$0xff]
    %v287 = vld [vmem:[#allocation5 + $0x4b8] sm:$0xff]
    %v288 = vld [vmem:[#allocation5 + $0x4c0] sm:$0xff]
    %v289 = vld [vmem:[#allocation5 + $0x4c8] sm:$0xff]
    %v290 = vld [vmem:[#allocation5 + $0x4d0] sm:$0xff]
    %v291 = vld [vmem:[#allocation5 + $0x4d8] sm:$0xff]
    %v292 = vld [vmem:[#allocation5 + $0x4e0] sm:$0xff]
    %v293 = vld [vmem:[#allocation5 + $0x4e8] sm:$0xff]
    %v294 = vld [vmem:[#allocation5 + $0x4f0] sm:$0xff]
    %v295 = vld [vmem:[#allocation5 + $0x4f8] sm:$0xff]
    %v296 = vld [vmem:[#allocation5 + $0x500] sm:$0xff]
    %v297 = vld [vmem:[#allocation5 + $0x508] sm:$0xff]
    %v298 = vld [vmem:[#allocation5 + $0x510] sm:$0xff]
    %v299 = vld [vmem:[#allocation5 + $0x518] sm:$0xff]
    %v300 = vld [vmem:[#allocation5 + $0x520] sm:$0xff]
    %v301 = vld [vmem:[#allocation5 + $0x528] sm:$0xff]
    %v302 = vld [vmem:[#allocation5 + $0x530] sm:$0xff]
    %v303 = vld [vmem:[#allocation5 + $0x538] sm:$0xff]
    %v304 = vld [vmem:[#allocation5 + $0x540] sm:$0xff]
    %v305 = vld [vmem:[#allocation5 + $0x548] sm:$0xff]
    %v306 = vld [vmem:[#allocation5 + $0x550] sm:$0xff]
    %v307 = vld [vmem:[#allocation5 + $0x558] sm:$0xff]
    %v308 = vld [vmem:[#allocation5 + $0x560] sm:$0xff]
    %v309 = vld [vmem:[#allocation5 + $0x568] sm:$0xff]
    %v310 = vld [vmem:[#allocation5 + $0x570] sm:$0xff]
    %v311 = vld [vmem:[#allocation5 + $0x578] sm:$0xff]
    %v312 = vld [vmem:[#allocation5 + $0x580] sm:$0xff]
    %v313 = vld [vmem:[#allocation5 + $0x588] sm:$0xff]
    %v314 = vld [vmem:[#allocation5 + $0x590] sm:$0xff]
    %v315 = vld [vmem:[#allocation5 + $0x598] sm:$0xff]
    %v316 = vld [vmem:[#allocation5 + $0x5a0] sm:$0xff]
    %v317 = vld [vmem:[#allocation5 + $0x5a8] sm:$0xff]
    %v318 = vld [vmem:[#allocation5 + $0x5b0] sm:$0xff]
    %v319 = vld [vmem:[#allocation5 + $0x5b8] sm:$0xff]
    %v320 = vld [vmem:[#allocation5 + $0x5c0] sm:$0xff]
    %v321 = vld [vmem:[#allocation5 + $0x5c8] sm:$0xff]
    %v322 = vld [vmem:[#allocation5 + $0x5d0] sm:$0xff]
    %v323 = vld [vmem:[#allocation5 + $0x5d8] sm:$0xff]
    %v324 = vld [vmem:[#allocation5 + $0x5e0] sm:$0xff]
    %v325 = vld [vmem:[#allocation5 + $0x5e8] sm:$0xff]
    %v326 = vld [vmem:[#allocation5 + $0x5f0] sm:$0xff]
    %v327 = vld [vmem:[#allocation5 + $0x5f8] sm:$0xff]
    %v328 = vld [vmem:[#allocation5 + $0x600] sm:$0xff]
    %v329 = vld [vmem:[#allocation5 + $0x608] sm:$0xff]
    %v330 = vld [vmem:[#allocation5 + $0x610] sm:$0xff]
    %v331 = vld [vmem:[#allocation5 + $0x618] sm:$0xff]
    %v332 = vld [vmem:[%s3] sm:$0xf]
    %v334 = vlaneseq
    %v335 = vshrl.u32 %v334, 7
    %v336 = vsub.s32 0, %v335
    %v337 = vrot.slane %v332, %v336
    %v338 = vlaneseq
    %v339 = vshrl.u32 %v338, 7
    %v340 = vsub.s32 1, %v339
    %v341 = vrot.slane %v332, %v340
    %v342 = vlaneseq
    %v343 = vshrl.u32 %v342, 7
    %v344 = vsub.s32 2, %v343
    %v345 = vrot.slane %v332, %v344
    %v346 = vlaneseq
    %v347 = vshrl.u32 %v346, 7
    %v348 = vsub.s32 3, %v347
    %v349 = vrot.slane %v332, %v348
    %v362 = vunpack.c.l.b16 %v128
    %v363 = vunpack.c.h.b16 %v128
    %v364 = vunpack.c.l.b16 %v129
    %v365 = vunpack.c.h.b16 %v129
    %v366 = vunpack.c.l.b16 %v130
    %v367 = vunpack.c.h.b16 %v130
    %v368 = vunpack.c.l.b16 %v131
    %v369 = vunpack.c.l.b16 %v132
    %v370 = vunpack.c.h.b16 %v132
    %v371 = vunpack.c.l.b16 %v133
    %v372 = vunpack.c.h.b16 %v133
    %v373 = vunpack.c.l.b16 %v134
    %v374 = vunpack.c.h.b16 %v134
    %v375 = vunpack.c.l.b16 %v135
    %v376 = vpack.c.b16 %v369, %v362
    %v377 = vpack.c.b16 %v370, %v363
    %v378 = vpack.c.b16 %v371, %v364
    %v379 = vpack.c.b16 %v372, %v365
    %v380 = vpack.c.b16 %v373, %v366
    %v381 = vpack.c.b16 %v374, %v367
    %v382 = vpack.c.b16 %v375, %v368
    %v585 = vunpack.c.l.b16 %v136
    %v586 = vunpack.c.h.b16 %v136
    %v587 = vunpack.c.l.b16 %v137
    %v588 = vunpack.c.h.b16 %v137
    %v589 = vunpack.c.l.b16 %v138
    %v590 = vunpack.c.h.b16 %v138
    %v591 = vunpack.c.l.b16 %v139
    %v592 = vunpack.c.h.b16 %v139
    %v593 = vunpack.c.l.b16 %v140
    %v594 = vunpack.c.h.b16 %v140
    %v595 = vunpack.c.l.b16 %v141
    %v596 = vunpack.c.h.b16 %v141
    %v597 = vunpack.c.l.b16 %v142
    %v598 = vunpack.c.h.b16 %v142
    %v599 = vunpack.c.l.b16 %v143
    %v600 = vunpack.c.h.b16 %v143
    %v601 = vunpack.c.l.b16 %v144
    %v602 = vunpack.c.h.b16 %v144
    %v603 = vunpack.c.l.b16 %v145
    %v604 = vunpack.c.h.b16 %v145
    %v605 = vunpack.c.l.b16 %v146
    %v606 = vunpack.c.h.b16 %v146
    %v607 = vunpack.c.l.b16 %v147
    %v608 = vunpack.c.h.b16 %v147
    %v609 = vunpack.c.l.b16 %v148
    %v610 = vunpack.c.h.b16 %v148
    %v611 = vunpack.c.l.b16 %v149
    %v612 = vunpack.c.h.b16 %v149
    %v613 = vunpack.c.l.b16 %v150
    %v614 = vunpack.c.h.b16 %v150
    %v615 = vunpack.c.l.b16 %v151
    %v616 = vunpack.c.h.b16 %v151
    %v617 = vunpack.c.l.b16 %v152
    %v618 = vunpack.c.h.b16 %v152
    %v619 = vunpack.c.l.b16 %v153
    %v620 = vunpack.c.h.b16 %v153
    %v621 = vunpack.c.l.b16 %v154
    %v622 = vunpack.c.h.b16 %v154
    %v623 = vunpack.c.l.b16 %v155
    %v624 = vunpack.c.h.b16 %v155
    %v625 = vunpack.c.l.b16 %v156
    %v626 = vunpack.c.h.b16 %v156
    %v627 = vunpack.c.l.b16 %v157
    %v628 = vunpack.c.h.b16 %v157
    %v629 = vunpack.c.l.b16 %v158
    %v630 = vunpack.c.h.b16 %v158
    %v631 = vunpack.c.l.b16 %v159
    %v632 = vunpack.c.h.b16 %v159
    %v633 = vunpack.c.l.b16 %v160
    %v634 = vunpack.c.h.b16 %v160
    %v635 = vunpack.c.l.b16 %v161
    %v636 = vunpack.c.h.b16 %v161
    %v637 = vunpack.c.l.b16 %v162
    %v638 = vunpack.c.h.b16 %v162
    %v639 = vunpack.c.l.b16 %v163
    %v640 = vunpack.c.h.b16 %v163
    %v641 = vunpack.c.l.b16 %v164
    %v642 = vunpack.c.h.b16 %v164
    %v643 = vunpack.c.l.b16 %v165
    %v644 = vunpack.c.h.b16 %v165
    %v645 = vunpack.c.l.b16 %v166
    %v646 = vunpack.c.h.b16 %v166
    %v647 = vunpack.c.l.b16 %v167
    %v648 = vunpack.c.h.b16 %v167
    %v649 = vunpack.c.l.b16 %v168
    %v650 = vunpack.c.h.b16 %v168
    %v651 = vunpack.c.l.b16 %v169
    %v652 = vunpack.c.h.b16 %v169
    %v653 = vunpack.c.l.b16 %v170
    %v654 = vunpack.c.h.b16 %v170
    %v655 = vunpack.c.l.b16 %v171
    %v656 = vunpack.c.h.b16 %v171
    %v657 = vunpack.c.l.b16 %v172
    %v658 = vunpack.c.h.b16 %v172
    %v659 = vunpack.c.l.b16 %v173
    %v660 = vunpack.c.h.b16 %v173
    %v661 = vunpack.c.l.b16 %v174
    %v662 = vunpack.c.h.b16 %v174
    %v663 = vunpack.c.l.b16 %v175
    %v664 = vunpack.c.h.b16 %v175
    %v665 = vunpack.c.l.b16 %v176
    %v666 = vunpack.c.h.b16 %v176
    %v667 = vunpack.c.l.b16 %v177
    %v668 = vunpack.c.h.b16 %v177
    %v669 = vunpack.c.l.b16 %v178
    %v670 = vunpack.c.h.b16 %v178
    %v671 = vunpack.c.l.b16 %v179
    %v672 = vunpack.c.h.b16 %v179
    %v673 = vunpack.c.l.b16 %v180
    %v674 = vunpack.c.h.b16 %v180
    %v675 = vunpack.c.l.b16 %v181
    %v676 = vunpack.c.h.b16 %v181
    %v677 = vunpack.c.l.b16 %v182
    %v678 = vunpack.c.h.b16 %v182
    %v679 = vunpack.c.l.b16 %v183
    %v680 = vunpack.c.h.b16 %v183
    %v681 = vunpack.c.l.b16 %v184
    %v682 = vunpack.c.h.b16 %v184
    %v683 = vunpack.c.l.b16 %v185
    %v684 = vunpack.c.h.b16 %v185
    %v685 = vunpack.c.l.b16 %v186
    %v686 = vunpack.c.h.b16 %v186
    %v687 = vunpack.c.l.b16 %v187
    %v688 = vunpack.c.h.b16 %v187
    %v689 = vunpack.c.l.b16 %v188
    %v690 = vunpack.c.h.b16 %v188
    %v691 = vunpack.c.l.b16 %v189
    %v692 = vunpack.c.h.b16 %v189
    %v693 = vunpack.c.l.b16 %v190
    %v694 = vunpack.c.h.b16 %v190
    %v695 = vunpack.c.l.b16 %v191
    %v696 = vunpack.c.h.b16 %v191
    %v697 = vunpack.c.l.b16 %v192
    %v698 = vunpack.c.h.b16 %v192
    %v699 = vunpack.c.l.b16 %v193
    %v700 = vunpack.c.h.b16 %v193
    %v701 = vunpack.c.l.b16 %v194
    %v702 = vunpack.c.h.b16 %v194
    %v703 = vunpack.c.l.b16 %v195
    %v704 = vunpack.c.h.b16 %v195
    %v705 = vunpack.c.l.b16 %v196
    %v706 = vunpack.c.h.b16 %v196
    %v707 = vunpack.c.l.b16 %v197
    %v708 = vunpack.c.h.b16 %v197
    %v709 = vunpack.c.l.b16 %v198
    %v710 = vunpack.c.h.b16 %v198
    %v711 = vunpack.c.l.b16 %v199
    %v712 = vunpack.c.h.b16 %v199
    %v713 = vunpack.c.l.b16 %v200
    %v714 = vunpack.c.h.b16 %v200
    %v715 = vunpack.c.l.b16 %v201
    %v716 = vunpack.c.h.b16 %v201
    %v717 = vunpack.c.l.b16 %v202
    %v718 = vunpack.c.h.b16 %v202
    %v719 = vunpack.c.l.b16 %v203
    %v720 = vunpack.c.h.b16 %v203
    %v721 = vunpack.c.l.b16 %v204
    %v722 = vunpack.c.h.b16 %v204
    %v723 = vunpack.c.l.b16 %v205
    %v724 = vunpack.c.h.b16 %v205
    %v725 = vunpack.c.l.b16 %v206
    %v726 = vunpack.c.h.b16 %v206
    %v727 = vunpack.c.l.b16 %v207
    %v728 = vunpack.c.h.b16 %v207
    %v729 = vunpack.c.l.b16 %v208
    %v730 = vunpack.c.h.b16 %v208
    %v731 = vunpack.c.l.b16 %v209
    %v732 = vunpack.c.h.b16 %v209
    %v733 = vunpack.c.l.b16 %v210
    %v734 = vunpack.c.h.b16 %v210
    %v735 = vunpack.c.l.b16 %v211
    %v736 = vunpack.c.h.b16 %v211
    %v737 = vunpack.c.l.b16 %v212
    %v738 = vunpack.c.h.b16 %v212
    %v739 = vunpack.c.l.b16 %v213
    %v740 = vunpack.c.h.b16 %v213
    %v741 = vunpack.c.l.b16 %v214
    %v742 = vunpack.c.h.b16 %v214
    %v743 = vunpack.c.l.b16 %v215
    %v744 = vunpack.c.h.b16 %v215
    %v745 = vunpack.c.l.b16 %v216
    %v746 = vunpack.c.h.b16 %v216
    %v747 = vunpack.c.l.b16 %v217
    %v748 = vunpack.c.h.b16 %v217
    %v749 = vunpack.c.l.b16 %v218
    %v750 = vunpack.c.h.b16 %v218
    %v751 = vunpack.c.l.b16 %v219
    %v752 = vunpack.c.h.b16 %v219
    %v753 = vunpack.c.l.b16 %v220
    %v754 = vunpack.c.h.b16 %v220
    %v755 = vunpack.c.l.b16 %v221
    %v756 = vunpack.c.h.b16 %v221
    %v757 = vunpack.c.l.b16 %v222
    %v758 = vunpack.c.h.b16 %v222
    %v759 = vunpack.c.l.b16 %v223
    %v760 = vunpack.c.h.b16 %v223
    %v761 = vunpack.c.l.b16 %v224
    %v762 = vunpack.c.h.b16 %v224
    %v763 = vunpack.c.l.b16 %v225
    %v764 = vunpack.c.h.b16 %v225
    %v765 = vunpack.c.l.b16 %v226
    %v766 = vunpack.c.h.b16 %v226
    %v767 = vunpack.c.l.b16 %v227
    %v768 = vunpack.c.h.b16 %v227
    %v769 = vunpack.c.l.b16 %v228
    %v770 = vunpack.c.h.b16 %v228
    %v771 = vunpack.c.l.b16 %v229
    %v772 = vunpack.c.h.b16 %v229
    %v773 = vunpack.c.l.b16 %v230
    %v774 = vunpack.c.h.b16 %v230
    %v775 = vunpack.c.l.b16 %v231
    %v776 = vunpack.c.h.b16 %v231
    %v777 = vunpack.c.l.b16 %v232
    %v778 = vunpack.c.h.b16 %v232
    %v779 = vunpack.c.l.b16 %v233
    %v780 = vunpack.c.h.b16 %v233
    %v781 = vunpack.c.l.b16 %v234
    %v782 = vunpack.c.h.b16 %v234
    %v783 = vunpack.c.l.b16 %v235
    %v784 = vunpack.c.h.b16 %v235
    %v785 = vunpack.c.l.b16 %v236
    %v786 = vunpack.c.h.b16 %v236
    %v787 = vunpack.c.l.b16 %v237
    %v788 = vunpack.c.h.b16 %v237
    %v789 = vunpack.c.l.b16 %v238
    %v790 = vunpack.c.h.b16 %v238
    %v791 = vunpack.c.l.b16 %v239
    %v792 = vunpack.c.h.b16 %v239
    %v793 = vunpack.c.l.b16 %v240
    %v794 = vunpack.c.h.b16 %v240
    %v795 = vunpack.c.l.b16 %v241
    %v796 = vunpack.c.h.b16 %v241
    %v797 = vunpack.c.l.b16 %v242
    %v798 = vunpack.c.h.b16 %v242
    %v799 = vunpack.c.l.b16 %v243
    %v800 = vunpack.c.h.b16 %v243
    %v801 = vunpack.c.l.b16 %v244
    %v802 = vunpack.c.h.b16 %v244
    %v803 = vunpack.c.l.b16 %v245
    %v804 = vunpack.c.h.b16 %v245
    %v805 = vunpack.c.l.b16 %v246
    %v806 = vunpack.c.h.b16 %v246
    %v807 = vunpack.c.l.b16 %v247
    %v808 = vunpack.c.h.b16 %v247
    %v809 = vunpack.c.l.b16 %v248
    %v810 = vunpack.c.h.b16 %v248
    %v811 = vunpack.c.l.b16 %v249
    %v812 = vunpack.c.h.b16 %v249
    %v813 = vunpack.c.l.b16 %v250
    %v814 = vunpack.c.h.b16 %v250
    %v815 = vunpack.c.l.b16 %v251
    %v816 = vunpack.c.h.b16 %v251
    %v817 = vunpack.c.l.b16 %v252
    %v818 = vunpack.c.h.b16 %v252
    %v819 = vunpack.c.l.b16 %v253
    %v820 = vunpack.c.h.b16 %v253
    %v821 = vunpack.c.l.b16 %v254
    %v822 = vunpack.c.h.b16 %v254
    %v823 = vunpack.c.l.b16 %v255
    %v824 = vunpack.c.h.b16 %v255
    %v825 = vunpack.c.l.b16 %v256
    %v826 = vunpack.c.h.b16 %v256
    %v827 = vunpack.c.l.b16 %v257
    %v828 = vunpack.c.h.b16 %v257
    %v829 = vunpack.c.l.b16 %v258
    %v830 = vunpack.c.h.b16 %v258
    %v831 = vunpack.c.l.b16 %v259
    %v832 = vunpack.c.h.b16 %v259
    %v833 = vunpack.c.l.b16 %v260
    %v834 = vunpack.c.h.b16 %v260
    %v835 = vunpack.c.l.b16 %v261
    %v836 = vunpack.c.h.b16 %v261
    %v837 = vunpack.c.l.b16 %v262
    %v838 = vunpack.c.h.b16 %v262
    %v839 = vunpack.c.l.b16 %v263
    %v840 = vunpack.c.h.b16 %v263
    %v841 = vunpack.c.l.b16 %v264
    %v842 = vunpack.c.h.b16 %v264
    %v843 = vunpack.c.l.b16 %v265
    %v844 = vunpack.c.h.b16 %v265
    %v845 = vunpack.c.l.b16 %v266
    %v846 = vunpack.c.h.b16 %v266
    %v847 = vunpack.c.l.b16 %v267
    %v848 = vunpack.c.h.b16 %v267
    %v849 = vunpack.c.l.b16 %v268
    %v850 = vunpack.c.h.b16 %v268
    %v851 = vunpack.c.l.b16 %v269
    %v852 = vunpack.c.h.b16 %v269
    %v853 = vunpack.c.l.b16 %v270
    %v854 = vunpack.c.h.b16 %v270
    %v855 = vunpack.c.l.b16 %v271
    %v856 = vunpack.c.h.b16 %v271
    %v857 = vunpack.c.l.b16 %v272
    %v858 = vunpack.c.h.b16 %v272
    %v859 = vunpack.c.l.b16 %v273
    %v860 = vunpack.c.h.b16 %v273
    %v861 = vunpack.c.l.b16 %v274
    %v862 = vunpack.c.h.b16 %v274
    %v863 = vunpack.c.l.b16 %v275
    %v864 = vunpack.c.h.b16 %v275
    %v865 = vunpack.c.l.b16 %v276
    %v866 = vunpack.c.h.b16 %v276
    %v867 = vunpack.c.l.b16 %v277
    %v868 = vunpack.c.h.b16 %v277
    %v869 = vunpack.c.l.b16 %v278
    %v870 = vunpack.c.h.b16 %v278
    %v871 = vunpack.c.l.b16 %v279
    %v872 = vunpack.c.h.b16 %v279
    %v873 = vunpack.c.l.b16 %v280
    %v874 = vunpack.c.h.b16 %v280
    %v875 = vunpack.c.l.b16 %v281
    %v876 = vunpack.c.h.b16 %v281
    %v877 = vunpack.c.l.b16 %v282
    %v878 = vunpack.c.h.b16 %v282
    %v879 = vunpack.c.l.b16 %v283
    %v880 = vunpack.c.h.b16 %v283
    %v881 = vunpack.c.l.b16 %v284
    %v882 = vunpack.c.h.b16 %v284
    %v883 = vunpack.c.l.b16 %v285
    %v884 = vunpack.c.h.b16 %v285
    %v885 = vunpack.c.l.b16 %v286
    %v886 = vunpack.c.h.b16 %v286
    %v887 = vunpack.c.l.b16 %v287
    %v888 = vunpack.c.h.b16 %v287
    %v889 = vunpack.c.l.b16 %v288
    %v890 = vunpack.c.h.b16 %v288
    %v891 = vunpack.c.l.b16 %v289
    %v892 = vunpack.c.h.b16 %v289
    %v893 = vunpack.c.l.b16 %v290
    %v894 = vunpack.c.h.b16 %v290
    %v895 = vunpack.c.l.b16 %v291
    %v896 = vunpack.c.h.b16 %v291
    %v897 = vunpack.c.l.b16 %v292
    %v898 = vunpack.c.h.b16 %v292
    %v899 = vunpack.c.l.b16 %v293
    %v900 = vunpack.c.h.b16 %v293
    %v901 = vunpack.c.l.b16 %v294
    %v902 = vunpack.c.h.b16 %v294
    %v903 = vunpack.c.l.b16 %v295
    %v904 = vunpack.c.h.b16 %v295
    %v905 = vunpack.c.l.b16 %v296
    %v906 = vunpack.c.h.b16 %v296
    %v907 = vunpack.c.l.b16 %v297
    %v908 = vunpack.c.h.b16 %v297
    %v909 = vunpack.c.l.b16 %v298
    %v910 = vunpack.c.h.b16 %v298
    %v911 = vunpack.c.l.b16 %v299
    %v912 = vunpack.c.h.b16 %v299
    %v913 = vunpack.c.l.b16 %v300
    %v914 = vunpack.c.h.b16 %v300
    %v915 = vunpack.c.l.b16 %v301
    %v916 = vunpack.c.h.b16 %v301
    %v917 = vunpack.c.l.b16 %v302
    %v918 = vunpack.c.h.b16 %v302
    %v919 = vunpack.c.l.b16 %v303
    %v920 = vunpack.c.h.b16 %v303
    %v921 = vunpack.c.l.b16 %v304
    %v922 = vunpack.c.h.b16 %v304
    %v923 = vunpack.c.l.b16 %v305
    %v924 = vunpack.c.h.b16 %v305
    %v925 = vunpack.c.l.b16 %v306
    %v926 = vunpack.c.h.b16 %v306
    %v927 = vunpack.c.l.b16 %v307
    %v928 = vunpack.c.h.b16 %v307
    %v929 = vunpack.c.l.b16 %v308
    %v930 = vunpack.c.h.b16 %v308
    %v931 = vunpack.c.l.b16 %v309
    %v932 = vunpack.c.h.b16 %v309
    %v933 = vunpack.c.l.b16 %v310
    %v934 = vunpack.c.h.b16 %v310
    %v935 = vunpack.c.l.b16 %v311
    %v936 = vunpack.c.h.b16 %v311
    %v937 = vunpack.c.l.b16 %v312
    %v938 = vunpack.c.h.b16 %v312
    %v939 = vunpack.c.l.b16 %v313
    %v940 = vunpack.c.h.b16 %v313
    %v941 = vunpack.c.l.b16 %v314
    %v942 = vunpack.c.h.b16 %v314
    %v943 = vunpack.c.l.b16 %v315
    %v944 = vunpack.c.h.b16 %v315
    %v945 = vunpack.c.l.b16 %v316
    %v946 = vunpack.c.h.b16 %v316
    %v947 = vunpack.c.l.b16 %v317
    %v948 = vunpack.c.h.b16 %v317
    %v949 = vunpack.c.l.b16 %v318
    %v950 = vunpack.c.h.b16 %v318
    %v951 = vunpack.c.l.b16 %v319
    %v952 = vunpack.c.h.b16 %v319
    %v953 = vunpack.c.l.b16 %v320
    %v954 = vunpack.c.h.b16 %v320
    %v955 = vunpack.c.l.b16 %v321
    %v956 = vunpack.c.h.b16 %v321
    %v957 = vunpack.c.l.b16 %v322
    %v958 = vunpack.c.h.b16 %v322
    %v959 = vunpack.c.l.b16 %v323
    %v960 = vunpack.c.h.b16 %v323
    %v961 = vunpack.c.l.b16 %v324
    %v962 = vunpack.c.h.b16 %v324
    %v963 = vunpack.c.l.b16 %v325
    %v964 = vunpack.c.h.b16 %v325
    %v965 = vunpack.c.l.b16 %v326
    %v966 = vunpack.c.h.b16 %v326
    %v967 = vunpack.c.l.b16 %v327
    %v968 = vunpack.c.h.b16 %v327
    %v969 = vunpack.c.l.b16 %v328
    %v970 = vunpack.c.h.b16 %v328
    %v971 = vunpack.c.l.b16 %v329
    %v972 = vunpack.c.h.b16 %v329
    %v973 = vunpack.c.l.b16 %v330
    %v974 = vunpack.c.h.b16 %v330
    %v975 = vunpack.c.l.b16 %v331
    %v976 = vunpack.c.h.b16 %v331
    %v977 = vpack.c.b16 %v589, %v585
    %v978 = vpack.c.b16 %v590, %v586
    %v979 = vpack.c.b16 %v591, %v587
    %v980 = vpack.c.b16 %v592, %v588
    %v981 = vpack.c.b16 %v597, %v593
    %v982 = vpack.c.b16 %v598, %v594
    %v983 = vpack.c.b16 %v599, %v595
    %v984 = vpack.c.b16 %v600, %v596
    %v985 = vpack.c.b16 %v605, %v601
    %v986 = vpack.c.b16 %v606, %v602
    %v987 = vpack.c.b16 %v607, %v603
    %v988 = vpack.c.b16 %v608, %v604
    %v989 = vpack.c.b16 %v613, %v609
    %v990 = vpack.c.b16 %v614, %v610
    %v991 = vpack.c.b16 %v615, %v611
    %v992 = vpack.c.b16 %v616, %v612
    %v993 = vpack.c.b16 %v621, %v617
    %v994 = vpack.c.b16 %v622, %v618
    %v995 = vpack.c.b16 %v623, %v619
    %v996 = vpack.c.b16 %v624, %v620
    %v997 = vpack.c.b16 %v629, %v625
    %v998 = vpack.c.b16 %v630, %v626
    %v999 = vpack.c.b16 %v631, %v627
    %v1000 = vpack.c.b16 %v632, %v628
    %v1001 = vpack.c.b16 %v637, %v633
    %v1002 = vpack.c.b16 %v638, %v634
    %v1003 = vpack.c.b16 %v639, %v635
    %v1004 = vpack.c.b16 %v640, %v636
    %v1005 = vpack.c.b16 %v645, %v641
    %v1006 = vpack.c.b16 %v646, %v642
    %v1007 = vpack.c.b16 %v647, %v643
    %v1008 = vpack.c.b16 %v648, %v644
    %v1009 = vpack.c.b16 %v653, %v649
    %v1010 = vpack.c.b16 %v654, %v650
    %v1011 = vpack.c.b16 %v655, %v651
    %v1012 = vpack.c.b16 %v656, %v652
    %v1013 = vpack.c.b16 %v661, %v657
    %v1014 = vpack.c.b16 %v662, %v658
    %v1015 = vpack.c.b16 %v663, %v659
    %v1016 = vpack.c.b16 %v664, %v660
    %v1017 = vpack.c.b16 %v669, %v665
    %v1018 = vpack.c.b16 %v670, %v666
    %v1019 = vpack.c.b16 %v671, %v667
    %v1020 = vpack.c.b16 %v672, %v668
    %v1021 = vpack.c.b16 %v677, %v673
    %v1022 = vpack.c.b16 %v678, %v674
    %v1023 = vpack.c.b16 %v679, %v675
    %v1024 = vpack.c.b16 %v680, %v676
    %v1025 = vpack.c.b16 %v685, %v681
    %v1026 = vpack.c.b16 %v686, %v682
    %v1027 = vpack.c.b16 %v687, %v683
    %v1028 = vpack.c.b16 %v688, %v684
    %v1029 = vpack.c.b16 %v693, %v689
    %v1030 = vpack.c.b16 %v694, %v690
    %v1031 = vpack.c.b16 %v695, %v691
    %v1032 = vpack.c.b16 %v696, %v692
    %v1033 = vpack.c.b16 %v701, %v697
    %v1034 = vpack.c.b16 %v702, %v698
    %v1035 = vpack.c.b16 %v703, %v699
    %v1036 = vpack.c.b16 %v704, %v700
    %v1037 = vpack.c.b16 %v709, %v705
    %v1038 = vpack.c.b16 %v710, %v706
    %v1039 = vpack.c.b16 %v711, %v707
    %v1040 = vpack.c.b16 %v712, %v708
    %v1041 = vpack.c.b16 %v717, %v713
    %v1042 = vpack.c.b16 %v718, %v714
    %v1043 = vpack.c.b16 %v719, %v715
    %v1044 = vpack.c.b16 %v720, %v716
    %v1045 = vpack.c.b16 %v725, %v721
    %v1046 = vpack.c.b16 %v726, %v722
    %v1047 = vpack.c.b16 %v727, %v723
    %v1048 = vpack.c.b16 %v728, %v724
    %v1049 = vpack.c.b16 %v733, %v729
    %v1050 = vpack.c.b16 %v734, %v730
    %v1051 = vpack.c.b16 %v735, %v731
    %v1052 = vpack.c.b16 %v736, %v732
    %v1053 = vpack.c.b16 %v741, %v737
    %v1054 = vpack.c.b16 %v742, %v738
    %v1055 = vpack.c.b16 %v743, %v739
    %v1056 = vpack.c.b16 %v744, %v740
    %v1057 = vpack.c.b16 %v749, %v745
    %v1058 = vpack.c.b16 %v750, %v746
    %v1059 = vpack.c.b16 %v751, %v747
    %v1060 = vpack.c.b16 %v752, %v748
    %v1061 = vpack.c.b16 %v757, %v753
    %v1062 = vpack.c.b16 %v758, %v754
    %v1063 = vpack.c.b16 %v759, %v755
    %v1064 = vpack.c.b16 %v760, %v756
    %v1065 = vpack.c.b16 %v765, %v761
    %v1066 = vpack.c.b16 %v766, %v762
    %v1067 = vpack.c.b16 %v767, %v763
    %v1068 = vpack.c.b16 %v768, %v764
    %v1069 = vpack.c.b16 %v773, %v769
    %v1070 = vpack.c.b16 %v774, %v770
    %v1071 = vpack.c.b16 %v775, %v771
    %v1072 = vpack.c.b16 %v776, %v772
    %v1073 = vpack.c.b16 %v781, %v777
    %v1074 = vpack.c.b16 %v782, %v778
    %v1075 = vpack.c.b16 %v783, %v779
    %v1076 = vpack.c.b16 %v784, %v780
    %v1077 = vpack.c.b16 %v789, %v785
    %v1078 = vpack.c.b16 %v790, %v786
    %v1079 = vpack.c.b16 %v791, %v787
    %v1080 = vpack.c.b16 %v792, %v788
    %v1081 = vpack.c.b16 %v797, %v793
    %v1082 = vpack.c.b16 %v798, %v794
    %v1083 = vpack.c.b16 %v799, %v795
    %v1084 = vpack.c.b16 %v800, %v796
    %v1085 = vpack.c.b16 %v805, %v801
    %v1086 = vpack.c.b16 %v806, %v802
    %v1087 = vpack.c.b16 %v807, %v803
    %v1088 = vpack.c.b16 %v808, %v804
    %v1089 = vpack.c.b16 %v813, %v809
    %v1090 = vpack.c.b16 %v814, %v810
    %v1091 = vpack.c.b16 %v815, %v811
    %v1092 = vpack.c.b16 %v816, %v812
    %v1093 = vpack.c.b16 %v821, %v817
    %v1094 = vpack.c.b16 %v822, %v818
    %v1095 = vpack.c.b16 %v823, %v819
    %v1096 = vpack.c.b16 %v824, %v820
    %v1097 = vpack.c.b16 %v829, %v825
    %v1098 = vpack.c.b16 %v830, %v826
    %v1099 = vpack.c.b16 %v831, %v827
    %v1100 = vpack.c.b16 %v832, %v828
    %v1101 = vpack.c.b16 %v837, %v833
    %v1102 = vpack.c.b16 %v838, %v834
    %v1103 = vpack.c.b16 %v839, %v835
    %v1104 = vpack.c.b16 %v840, %v836
    %v1105 = vpack.c.b16 %v845, %v841
    %v1106 = vpack.c.b16 %v846, %v842
    %v1107 = vpack.c.b16 %v847, %v843
    %v1108 = vpack.c.b16 %v848, %v844
    %v1109 = vpack.c.b16 %v853, %v849
    %v1110 = vpack.c.b16 %v854, %v850
    %v1111 = vpack.c.b16 %v855, %v851
    %v1112 = vpack.c.b16 %v856, %v852
    %v1113 = vpack.c.b16 %v861, %v857
    %v1114 = vpack.c.b16 %v862, %v858
    %v1115 = vpack.c.b16 %v863, %v859
    %v1116 = vpack.c.b16 %v864, %v860
    %v1117 = vpack.c.b16 %v869, %v865
    %v1118 = vpack.c.b16 %v870, %v866
    %v1119 = vpack.c.b16 %v871, %v867
    %v1120 = vpack.c.b16 %v872, %v868
    %v1121 = vpack.c.b16 %v877, %v873
    %v1122 = vpack.c.b16 %v878, %v874
    %v1123 = vpack.c.b16 %v879, %v875
    %v1124 = vpack.c.b16 %v880, %v876
    %v1125 = vpack.c.b16 %v885, %v881
    %v1126 = vpack.c.b16 %v886, %v882
    %v1127 = vpack.c.b16 %v887, %v883
    %v1128 = vpack.c.b16 %v888, %v884
    %v1129 = vpack.c.b16 %v893, %v889
    %v1130 = vpack.c.b16 %v894, %v890
    %v1131 = vpack.c.b16 %v895, %v891
    %v1132 = vpack.c.b16 %v896, %v892
    %v1133 = vpack.c.b16 %v901, %v897
    %v1134 = vpack.c.b16 %v902, %v898
    %v1135 = vpack.c.b16 %v903, %v899
    %v1136 = vpack.c.b16 %v904, %v900
    %v1137 = vpack.c.b16 %v909, %v905
    %v1138 = vpack.c.b16 %v910, %v906
    %v1139 = vpack.c.b16 %v911, %v907
    %v1140 = vpack.c.b16 %v912, %v908
    %v1141 = vpack.c.b16 %v917, %v913
    %v1142 = vpack.c.b16 %v918, %v914
    %v1143 = vpack.c.b16 %v919, %v915
    %v1144 = vpack.c.b16 %v920, %v916
    %v1145 = vpack.c.b16 %v925, %v921
    %v1146 = vpack.c.b16 %v926, %v922
    %v1147 = vpack.c.b16 %v927, %v923
    %v1148 = vpack.c.b16 %v928, %v924
    %v1149 = vpack.c.b16 %v933, %v929
    %v1150 = vpack.c.b16 %v934, %v930
    %v1151 = vpack.c.b16 %v935, %v931
    %v1152 = vpack.c.b16 %v936, %v932
    %v1153 = vpack.c.b16 %v941, %v937
    %v1154 = vpack.c.b16 %v942, %v938
    %v1155 = vpack.c.b16 %v943, %v939
    %v1156 = vpack.c.b16 %v944, %v940
    %v1157 = vpack.c.b16 %v949, %v945
    %v1158 = vpack.c.b16 %v950, %v946
    %v1159 = vpack.c.b16 %v951, %v947
    %v1160 = vpack.c.b16 %v952, %v948
    %v1161 = vpack.c.b16 %v957, %v953
    %v1162 = vpack.c.b16 %v958, %v954
    %v1163 = vpack.c.b16 %v959, %v955
    %v1164 = vpack.c.b16 %v960, %v956
    %v1165 = vpack.c.b16 %v965, %v961
    %v1166 = vpack.c.b16 %v966, %v962
    %v1167 = vpack.c.b16 %v967, %v963
    %v1168 = vpack.c.b16 %v968, %v964
    %v1169 = vpack.c.b16 %v973, %v969
    %v1170 = vpack.c.b16 %v974, %v970
    %v1171 = vpack.c.b16 %v975, %v971
    %v1172 = vpack.c.b16 %v976, %v972
    %vm1369 = vcmask 130048
    %v1371 = vsel %vm1369, %v382, 0
    %1373 = vmatprep.subr.bf16.mxu0 %v1006
    %1374 = vmatpush1.bf16.msra.mxu0 %v1005
    %1375 = vmatprep.subr.bf16.mxu0 %v1002
    %1376 = vmatpush1.bf16.msra.mxu0 %v1001
    %1377 = vmatprep.subr.bf16.mxu0 %v998
    %1378 = vmatpush1.bf16.msra.mxu0 %v997
    %1379 = vmatprep.subr.bf16.mxu0 %v994
    %1380 = vmatpush1.bf16.msra.mxu0 %v993
    %1381 = vmatprep.subr.bf16.mxu0 %v990
    %1382 = vmatpush1.bf16.msra.mxu0 %v989
    %1383 = vmatprep.subr.bf16.mxu0 %v986
    %1384 = vmatpush1.bf16.msra.mxu0 %v985
    %1385 = vmatprep.subr.bf16.mxu0 %v982
    %1386 = vmatpush1.bf16.msra.mxu0 %v981
    %1387 = vmatprep.subr.bf16.mxu0 %v978
    %1388 = vmatpush1.bf16.msra.mxu0 %v977
    %1389 = vmatprep.subr.bf16.mxu0 %v1038
    %1390 = vmatpush2.bf16.msra.mxu0 %v1037
    %1391 = vmatprep.subr.bf16.mxu0 %v1034
    %1392 = vmatpush2.bf16.msra.mxu0 %v1033
    %1393 = vmatprep.subr.bf16.mxu0 %v1030
    %1394 = vmatpush2.bf16.msra.mxu0 %v1029
    %1395 = vmatprep.subr.bf16.mxu0 %v1026
    %1396 = vmatpush2.bf16.msra.mxu0 %v1025
    %1397 = vmatprep.subr.bf16.mxu0 %v1022
    %1398 = vmatpush2.bf16.msra.mxu0 %v1021
    %1399 = vmatprep.subr.bf16.mxu0 %v1018
    %1400 = vmatpush2.bf16.msra.mxu0 %v1017
    %1401 = vmatprep.subr.bf16.mxu0 %v1014
    %1402 = vmatpush2.bf16.msra.mxu0 %v1013
    %1403 = vmatprep.subr.bf16.mxu0 %v1010
    %1404 = vmatpush2.bf16.msra.mxu0 %v1009
    %1405 = vmatprep.mubr.bf16.mxu0 %v377
    %1406 = vmatmul.mubr.bf16.gmra.mxu0 %v376
    %v1407 = vpop.f32.mrf.mxu0
    %v1408 = vadd.f32 %v337, %v1407
    %v1409 = vpop.f32.mrf.mxu0
    %v1410 = vadd.f32 %v341, %v1409
    %v1411 = vpop.f32.mrf.mxu0
    %v1412 = vadd.f32 %v337, %v1411
    %v1413 = vpop.f32.mrf.mxu0
    %v1414 = vadd.f32 %v341, %v1413
    %1415 = vdwg.mxu0
    %1416 = vmatprep.subr.bf16.mxu0 %v1070
    %1417 = vmatpush1.bf16.msra.mxu0 %v1069
    %1418 = vmatprep.subr.bf16.mxu0 %v1066
    %1419 = vmatpush1.bf16.msra.mxu0 %v1065
    %1420 = vmatprep.subr.bf16.mxu0 %v1062
    %1421 = vmatpush1.bf16.msra.mxu0 %v1061
    %1422 = vmatprep.subr.bf16.mxu0 %v1058
    %1423 = vmatpush1.bf16.msra.mxu0 %v1057
    %1424 = vmatprep.subr.bf16.mxu0 %v1054
    %1425 = vmatpush1.bf16.msra.mxu0 %v1053
    %1426 = vmatprep.subr.bf16.mxu0 %v1050
    %1427 = vmatpush1.bf16.msra.mxu0 %v1049
    %1428 = vmatprep.subr.bf16.mxu0 %v1046
    %1429 = vmatpush1.bf16.msra.mxu0 %v1045
    %1430 = vmatprep.subr.bf16.mxu0 %v1042
    %1431 = vmatpush1.bf16.msra.mxu0 %v1041
    %1432 = vmatprep.subr.bf16.mxu0 %v1102
    %1433 = vmatpush2.bf16.msra.mxu0 %v1101
    %1434 = vmatprep.subr.bf16.mxu0 %v1098
    %1435 = vmatpush2.bf16.msra.mxu0 %v1097
    %1436 = vmatprep.subr.bf16.mxu0 %v1094
    %1437 = vmatpush2.bf16.msra.mxu0 %v1093
    %1438 = vmatprep.subr.bf16.mxu0 %v1090
    %1439 = vmatpush2.bf16.msra.mxu0 %v1089
    %1440 = vmatprep.subr.bf16.mxu0 %v1086
    %1441 = vmatpush2.bf16.msra.mxu0 %v1085
    %1442 = vmatprep.subr.bf16.mxu0 %v1082
    %1443 = vmatpush2.bf16.msra.mxu0 %v1081
    %1444 = vmatprep.subr.bf16.mxu0 %v1078
    %1445 = vmatpush2.bf16.msra.mxu0 %v1077
    %1446 = vmatprep.subr.bf16.mxu0 %v1074
    %1447 = vmatpush2.bf16.msra.mxu0 %v1073
    %1448 = vmatprep.mubr.bf16.mxu0 %v379
    %1449 = vmatmul.mubr.bf16.gmra.mxu0 %v378
    %v1450 = vpop.f32.mrf.mxu0
    %v1451 = vadd.f32 %v1408, %v1450
    %v1452 = vpop.f32.mrf.mxu0
    %v1453 = vadd.f32 %v1410, %v1452
    %v1454 = vpop.f32.mrf.mxu0
    %v1455 = vadd.f32 %v1412, %v1454
    %v1456 = vpop.f32.mrf.mxu0
    %v1457 = vadd.f32 %v1414, %v1456
    %1458 = vdwg.mxu0
    %1459 = vmatprep.subr.bf16.mxu0 %v1134
    %1460 = vmatpush1.bf16.msra.mxu0 %v1133
    %1461 = vmatprep.subr.bf16.mxu0 %v1130
    %1462 = vmatpush1.bf16.msra.mxu0 %v1129
    %1463 = vmatprep.subr.bf16.mxu0 %v1126
    %1464 = vmatpush1.bf16.msra.mxu0 %v1125
    %1465 = vmatprep.subr.bf16.mxu0 %v1122
    %1466 = vmatpush1.bf16.msra.mxu0 %v1121
    %1467 = vmatprep.subr.bf16.mxu0 %v1118
    %1468 = vmatpush1.bf16.msra.mxu0 %v1117
    %1469 = vmatprep.subr.bf16.mxu0 %v1114
    %1470 = vmatpush1.bf16.msra.mxu0 %v1113
    %1471 = vmatprep.subr.bf16.mxu0 %v1110
    %1472 = vmatpush1.bf16.msra.mxu0 %v1109
    %1473 = vmatprep.subr.bf16.mxu0 %v1106
    %1474 = vmatpush1.bf16.msra.mxu0 %v1105
    %1475 = vmatprep.subr.bf16.mxu0 %v1166
    %1476 = vmatpush2.bf16.msra.mxu0 %v1165
    %1477 = vmatprep.subr.bf16.mxu0 %v1162
    %1478 = vmatpush2.bf16.msra.mxu0 %v1161
    %1479 = vmatprep.subr.bf16.mxu0 %v1158
    %1480 = vmatpush2.bf16.msra.mxu0 %v1157
    %1481 = vmatprep.subr.bf16.mxu0 %v1154
    %1482 = vmatpush2.bf16.msra.mxu0 %v1153
    %1483 = vmatprep.subr.bf16.mxu0 %v1150
    %1484 = vmatpush2.bf16.msra.mxu0 %v1149
    %1485 = vmatprep.subr.bf16.mxu0 %v1146
    %1486 = vmatpush2.bf16.msra.mxu0 %v1145
    %1487 = vmatprep.subr.bf16.mxu0 %v1142
    %1488 = vmatpush2.bf16.msra.mxu0 %v1141
    %1489 = vmatprep.subr.bf16.mxu0 %v1138
    %1490 = vmatpush2.bf16.msra.mxu0 %v1137
    %1491 = vmatprep.mubr.bf16.mxu0 %v381
    %1492 = vmatmul.mubr.bf16.gmra.mxu0 %v380
    %v1493 = vpop.f32.mrf.mxu0
    %v1494 = vadd.f32 %v1451, %v1493
    %v1495 = vpop.f32.mrf.mxu0
    %v1496 = vadd.f32 %v1453, %v1495
    %v1497 = vpop.f32.mrf.mxu0
    %v1498 = vadd.f32 %v1455, %v1497
    %v1499 = vpop.f32.mrf.mxu0
    %v1500 = vadd.f32 %v1457, %v1499
    %1501 = vdwg.mxu0
    %1502 = vmatprep.subr.bf16.mxu0 0
    %1503 = vmatpush1.bf16.msra.mxu0 0
    %1504 = vmatprep.subr.bf16.mxu0 0
    %1505 = vmatpush1.bf16.msra.mxu0 0
    %1506 = vmatprep.subr.bf16.mxu0 0
    %1507 = vmatpush1.bf16.msra.mxu0 0
    %1508 = vmatprep.subr.bf16.mxu0 0
    %1509 = vmatpush1.bf16.msra.mxu0 0
    %1510 = vmatprep.subr.bf16.mxu0 0
    %1511 = vmatpush1.bf16.msra.mxu0 0
    %1512 = vmatprep.subr.bf16.mxu0 0
    %1513 = vmatpush1.bf16.msra.mxu0 0
    %1514 = vmatprep.subr.bf16.mxu0 0
    %1515 = vmatpush1.bf16.msra.mxu0 0
    %1516 = vmatprep.subr.bf16.mxu0 %v1170
    %1517 = vmatpush1.bf16.msra.mxu0 %v1169
    %1518 = vmatprep.subr.bf16.mxu0 0
    %1519 = vmatpush2.bf16.msra.mxu0 0
    %1520 = vmatprep.subr.bf16.mxu0 0
    %1521 = vmatpush2.bf16.msra.mxu0 0
    %1522 = vmatprep.subr.bf16.mxu0 0
    %1523 = vmatpush2.bf16.msra.mxu0 0
    %1524 = vmatprep.subr.bf16.mxu0 0
    %1525 = vmatpush2.bf16.msra.mxu0 0
    %1526 = vmatprep.subr.bf16.mxu0 0
    %1527 = vmatpush2.bf16.msra.mxu0 0
    %1528 = vmatprep.subr.bf16.mxu0 0
    %1529 = vmatpush2.bf16.msra.mxu0 0
    %1530 = vmatprep.subr.bf16.mxu0 0
    %1531 = vmatpush2.bf16.msra.mxu0 0
    %1532 = vmatprep.subr.bf16.mxu0 0
    %1533 = vmatpush2.bf16.msra.mxu0 0
    %1534 = vmatprep.mubr.bf16.mxu0 0
    %1535 = vmatmul.mubr.bf16.gmra.mxu0 %v1371
    %v1536 = vpop.f32.mrf.mxu0
    %v1537 = vadd.f32 %v1494, %v1536
    %v1538 = vpop.f32.mrf.mxu0
    %v1539 = vadd.f32 %v1496, %v1538
    %v1540 = vpop.f32.mrf.mxu0
    %v1541 = vadd.f32 %v1498, %v1540
    %v1542 = vpop.f32.mrf.mxu0
    %v1543 = vadd.f32 %v1500, %v1542
    %1544 = vdwg.mxu0
    %1545 = vmatprep.subr.bf16.mxu0 %v1008
    %1546 = vmatpush1.bf16.msra.mxu0 %v1007
    %1547 = vmatprep.subr.bf16.mxu0 %v1004
    %1548 = vmatpush1.bf16.msra.mxu0 %v1003
    %1549 = vmatprep.subr.bf16.mxu0 %v1000
    %1550 = vmatpush1.bf16.msra.mxu0 %v999
    %1551 = vmatprep.subr.bf16.mxu0 %v996
    %1552 = vmatpush1.bf16.msra.mxu0 %v995
    %1553 = vmatprep.subr.bf16.mxu0 %v992
    %1554 = vmatpush1.bf16.msra.mxu0 %v991
    %1555 = vmatprep.subr.bf16.mxu0 %v988
    %1556 = vmatpush1.bf16.msra.mxu0 %v987
    %1557 = vmatprep.subr.bf16.mxu0 %v984
    %1558 = vmatpush1.bf16.msra.mxu0 %v983
    %1559 = vmatprep.subr.bf16.mxu0 %v980
    %1560 = vmatpush1.bf16.msra.mxu0 %v979
    %1561 = vmatprep.subr.bf16.mxu0 %v1040
    %1562 = vmatpush2.bf16.msra.mxu0 %v1039
    %1563 = vmatprep.subr.bf16.mxu0 %v1036
    %1564 = vmatpush2.bf16.msra.mxu0 %v1035
    %1565 = vmatprep.subr.bf16.mxu0 %v1032
    %1566 = vmatpush2.bf16.msra.mxu0 %v1031
    %1567 = vmatprep.subr.bf16.mxu0 %v1028
    %1568 = vmatpush2.bf16.msra.mxu0 %v1027
    %1569 = vmatprep.subr.bf16.mxu0 %v1024
    %1570 = vmatpush2.bf16.msra.mxu0 %v1023
    %1571 = vmatprep.subr.bf16.mxu0 %v1020
    %1572 = vmatpush2.bf16.msra.mxu0 %v1019
    %1573 = vmatprep.subr.bf16.mxu0 %v1016
    %1574 = vmatpush2.bf16.msra.mxu0 %v1015
    %1575 = vmatprep.subr.bf16.mxu0 %v1012
    %1576 = vmatpush2.bf16.msra.mxu0 %v1011
    %1577 = vmatprep.mubr.bf16.mxu0 %v377
    %1578 = vmatmul.mubr.bf16.gmra.mxu0 %v376
    %v1579 = vpop.f32.mrf.mxu0
    %v1580 = vadd.f32 %v345, %v1579
    %v1581 = vpop.f32.mrf.mxu0
    %v1582 = vadd.f32 %v349, %v1581
    %v1583 = vpop.f32.mrf.mxu0
    %v1584 = vadd.f32 %v345, %v1583
    %v1585 = vpop.f32.mrf.mxu0
    %v1586 = vadd.f32 %v349, %v1585
    %1587 = vdwg.mxu0
    %1588 = vmatprep.subr.bf16.mxu0 %v1072
    %1589 = vmatpush1.bf16.msra.mxu0 %v1071
    %1590 = vmatprep.subr.bf16.mxu0 %v1068
    %1591 = vmatpush1.bf16.msra.mxu0 %v1067
    %1592 = vmatprep.subr.bf16.mxu0 %v1064
    %1593 = vmatpush1.bf16.msra.mxu0 %v1063
    %1594 = vmatprep.subr.bf16.mxu0 %v1060
    %1595 = vmatpush1.bf16.msra.mxu0 %v1059
    %1596 = vmatprep.subr.bf16.mxu0 %v1056
    %1597 = vmatpush1.bf16.msra.mxu0 %v1055
    %1598 = vmatprep.subr.bf16.mxu0 %v1052
    %1599 = vmatpush1.bf16.msra.mxu0 %v1051
    %1600 = vmatprep.subr.bf16.mxu0 %v1048
    %1601 = vmatpush1.bf16.msra.mxu0 %v1047
    %1602 = vmatprep.subr.bf16.mxu0 %v1044
    %1603 = vmatpush1.bf16.msra.mxu0 %v1043
    %1604 = vmatprep.subr.bf16.mxu0 %v1104
    %1605 = vmatpush2.bf16.msra.mxu0 %v1103
    %1606 = vmatprep.subr.bf16.mxu0 %v1100
    %1607 = vmatpush2.bf16.msra.mxu0 %v1099
    %1608 = vmatprep.subr.bf16.mxu0 %v1096
    %1609 = vmatpush2.bf16.msra.mxu0 %v1095
    %1610 = vmatprep.subr.bf16.mxu0 %v1092
    %1611 = vmatpush2.bf16.msra.mxu0 %v1091
    %1612 = vmatprep.subr.bf16.mxu0 %v1088
    %1613 = vmatpush2.bf16.msra.mxu0 %v1087
    %1614 = vmatprep.subr.bf16.mxu0 %v1084
    %1615 = vmatpush2.bf16.msra.mxu0 %v1083
    %1616 = vmatprep.subr.bf16.mxu0 %v1080
    %1617 = vmatpush2.bf16.msra.mxu0 %v1079
    %1618 = vmatprep.subr.bf16.mxu0 %v1076
    %1619 = vmatpush2.bf16.msra.mxu0 %v1075
    %1620 = vmatprep.mubr.bf16.mxu0 %v379
    %1621 = vmatmul.mubr.bf16.gmra.mxu0 %v378
    %v1622 = vpop.f32.mrf.mxu0
    %v1623 = vadd.f32 %v1580, %v1622
    %v1624 = vpop.f32.mrf.mxu0
    %v1625 = vadd.f32 %v1582, %v1624
    %v1626 = vpop.f32.mrf.mxu0
    %v1627 = vadd.f32 %v1584, %v1626
    %v1628 = vpop.f32.mrf.mxu0
    %v1629 = vadd.f32 %v1586, %v1628
    %1630 = vdwg.mxu0
    %1631 = vmatprep.subr.bf16.mxu0 %v1136
    %1632 = vmatpush1.bf16.msra.mxu0 %v1135
    %1633 = vmatprep.subr.bf16.mxu0 %v1132
    %1634 = vmatpush1.bf16.msra.mxu0 %v1131
    %1635 = vmatprep.subr.bf16.mxu0 %v1128
    %1636 = vmatpush1.bf16.msra.mxu0 %v1127
    %1637 = vmatprep.subr.bf16.mxu0 %v1124
    %1638 = vmatpush1.bf16.msra.mxu0 %v1123
    %1639 = vmatprep.subr.bf16.mxu0 %v1120
    %1640 = vmatpush1.bf16.msra.mxu0 %v1119
    %1641 = vmatprep.subr.bf16.mxu0 %v1116
    %1642 = vmatpush1.bf16.msra.mxu0 %v1115
    %1643 = vmatprep.subr.bf16.mxu0 %v1112
    %1644 = vmatpush1.bf16.msra.mxu0 %v1111
    %1645 = vmatprep.subr.bf16.mxu0 %v1108
    %1646 = vmatpush1.bf16.msra.mxu0 %v1107
    %1647 = vmatprep.subr.bf16.mxu0 %v1168
    %1648 = vmatpush2.bf16.msra.mxu0 %v1167
    %1649 = vmatprep.subr.bf16.mxu0 %v1164
    %1650 = vmatpush2.bf16.msra.mxu0 %v1163
    %1651 = vmatprep.subr.bf16.mxu0 %v1160
    %1652 = vmatpush2.bf16.msra.mxu0 %v1159
    %1653 = vmatprep.subr.bf16.mxu0 %v1156
    %1654 = vmatpush2.bf16.msra.mxu0 %v1155
    %1655 = vmatprep.subr.bf16.mxu0 %v1152
    %1656 = vmatpush2.bf16.msra.mxu0 %v1151
    %1657 = vmatprep.subr.bf16.mxu0 %v1148
    %1658 = vmatpush2.bf16.msra.mxu0 %v1147
    %1659 = vmatprep.subr.bf16.mxu0 %v1144
    %1660 = vmatpush2.bf16.msra.mxu0 %v1143
    %1661 = vmatprep.subr.bf16.mxu0 %v1140
    %1662 = vmatpush2.bf16.msra.mxu0 %v1139
    %1663 = vmatprep.mubr.bf16.mxu0 %v381
    %1664 = vmatmul.mubr.bf16.gmra.mxu0 %v380
    %v1665 = vpop.f32.mrf.mxu0
    %v1666 = vadd.f32 %v1623, %v1665
    %v1667 = vpop.f32.mrf.mxu0
    %v1668 = vadd.f32 %v1625, %v1667
    %v1669 = vpop.f32.mrf.mxu0
    %v1670 = vadd.f32 %v1627, %v1669
    %v1671 = vpop.f32.mrf.mxu0
    %v1672 = vadd.f32 %v1629, %v1671
    %1673 = vdwg.mxu0
    %1674 = vmatprep.subr.bf16.mxu0 0
    %1675 = vmatpush1.bf16.msra.mxu0 0
    %1676 = vmatprep.subr.bf16.mxu0 0
    %1677 = vmatpush1.bf16.msra.mxu0 0
    %1678 = vmatprep.subr.bf16.mxu0 0
    %1679 = vmatpush1.bf16.msra.mxu0 0
    %1680 = vmatprep.subr.bf16.mxu0 0
    %1681 = vmatpush1.bf16.msra.mxu0 0
    %1682 = vmatprep.subr.bf16.mxu0 0
    %1683 = vmatpush1.bf16.msra.mxu0 0
    %1684 = vmatprep.subr.bf16.mxu0 0
    %1685 = vmatpush1.bf16.msra.mxu0 0
    %1686 = vmatprep.subr.bf16.mxu0 0
    %1687 = vmatpush1.bf16.msra.mxu0 0
    %1688 = vmatprep.subr.bf16.mxu0 %v1172
    %1689 = vmatpush1.bf16.msra.mxu0 %v1171
    %1690 = vmatprep.subr.bf16.mxu0 0
    %1691 = vmatpush2.bf16.msra.mxu0 0
    %1692 = vmatprep.subr.bf16.mxu0 0
    %1693 = vmatpush2.bf16.msra.mxu0 0
    %1694 = vmatprep.subr.bf16.mxu0 0
    %1695 = vmatpush2.bf16.msra.mxu0 0
    %1696 = vmatprep.subr.bf16.mxu0 0
    %1697 = vmatpush2.bf16.msra.mxu0 0
    %1698 = vmatprep.subr.bf16.mxu0 0
    %1699 = vmatpush2.bf16.msra.mxu0 0
    %1700 = vmatprep.subr.bf16.mxu0 0
    %1701 = vmatpush2.bf16.msra.mxu0 0
    %1702 = vmatprep.subr.bf16.mxu0 0
    %1703 = vmatpush2.bf16.msra.mxu0 0
    %1704 = vmatprep.subr.bf16.mxu0 0
    %1705 = vmatpush2.bf16.msra.mxu0 0
    %1706 = vmatprep.mubr.bf16.mxu0 0
    %1707 = vmatmul.mubr.bf16.gmra.mxu0 %v1371
    %v1708 = vpop.f32.mrf.mxu0
    %v1709 = vadd.f32 %v1666, %v1708
    %v1710 = vpop.f32.mrf.mxu0
    %v1711 = vadd.f32 %v1668, %v1710
    %v1712 = vpop.f32.mrf.mxu0
    %v1713 = vadd.f32 %v1670, %v1712
    %v1714 = vpop.f32.mrf.mxu0
    %v1715 = vadd.f32 %v1672, %v1714
    %1716 = vdwg.mxu0
    %v1717 = vmax.f32 %v1537, 0.0
    %v1718 = vmax.f32 %v1539, 0.0
    %v1719 = vmax.f32 %v1709, 0.0
    %v1720 = vmax.f32 %v1711, 0.0
    %v1721 = vmax.f32 %v1541, 0.0
    %v1722 = vmax.f32 %v1543, 0.0
    %v1723 = vmax.f32 %v1713, 0.0
    %v1724 = vmax.f32 %v1715, 0.0
    %v1725 = vpack.c.bf16 %v1721, %v1717
    %v1726 = vpack.c.bf16 %v1722, %v1718
    %v1727 = vpack.c.bf16 %v1723, %v1719
    %v1728 = vpack.c.bf16 %v1724, %v1720
    %v1729 = vld [vmem:[#allocation7] sm:$0xff]
    %v1730 = vld [vmem:[#allocation7 + $0x8] sm:$0xff]
    %v1731 = vld [vmem:[#allocation7 + $0x10] sm:$0xff]
    %v1732 = vld [vmem:[#allocation7 + $0x18] sm:$0xff]
    %v1733 = vld [vmem:[#allocation7 + $0x20] sm:$0xff]
    %v1734 = vld [vmem:[#allocation7 + $0x28] sm:$0xff]
    %v1735 = vld [vmem:[#allocation7 + $0x30] sm:$0xff]
    %v1736 = vld [vmem:[#allocation7 + $0x38] sm:$0xff]
    %v1737 = vld [vmem:[#allocation7 + $0x40] sm:$0xff]
    %v1738 = vld [vmem:[#allocation7 + $0x48] sm:$0xff]
    %v1739 = vld [vmem:[#allocation7 + $0x50] sm:$0xff]
    %v1740 = vld [vmem:[#allocation7 + $0x58] sm:$0xff]
    %v1741 = vld [vmem:[#allocation7 + $0x60] sm:$0xff]
    %v1742 = vld [vmem:[#allocation7 + $0x68] sm:$0xff]
    %v1743 = vld [vmem:[#allocation7 + $0x70] sm:$0xff]
    %v1744 = vld [vmem:[#allocation7 + $0x78] sm:$0xff]
    %v1745 = vld [vmem:[#allocation7 + $0x80] sm:$0xff]
    %v1746 = vld [vmem:[#allocation7 + $0x88] sm:$0xff]
    %v1747 = vld [vmem:[#allocation7 + $0x90] sm:$0xff]
    %v1748 = vld [vmem:[#allocation7 + $0x98] sm:$0xff]
    %v1749 = vld [vmem:[#allocation7 + $0xa0] sm:$0xff]
    %v1750 = vld [vmem:[#allocation7 + $0xa8] sm:$0xff]
    %v1751 = vld [vmem:[#allocation7 + $0xb0] sm:$0xff]
    %v1752 = vld [vmem:[#allocation7 + $0xb8] sm:$0xff]
    %v1753 = vld [vmem:[#allocation7 + $0xc0] sm:$0xff]
    %v1754 = vld [vmem:[#allocation7 + $0xc8] sm:$0xff]
    %v1755 = vld [vmem:[#allocation7 + $0xd0] sm:$0xff]
    %v1756 = vld [vmem:[#allocation7 + $0xd8] sm:$0xff]
    %v1757 = vld [vmem:[#allocation7 + $0xe0] sm:$0xff]
    %v1758 = vld [vmem:[#allocation7 + $0xe8] sm:$0xff]
    %v1759 = vld [vmem:[#allocation7 + $0xf0] sm:$0xff]
    %v1760 = vld [vmem:[#allocation7 + $0xf8] sm:$0xff]
    %v1761 = vld [vmem:[#allocation7 + $0x100] sm:$0xff]
    %v1762 = vld [vmem:[#allocation7 + $0x108] sm:$0xff]
    %v1763 = vld [vmem:[#allocation7 + $0x110] sm:$0xff]
    %v1764 = vld [vmem:[#allocation7 + $0x118] sm:$0xff]
    %v1765 = vld [vmem:[#allocation7 + $0x120] sm:$0xff]
    %v1766 = vld [vmem:[#allocation7 + $0x128] sm:$0xff]
    %v1767 = vld [vmem:[#allocation7 + $0x130] sm:$0xff]
    %v1768 = vld [vmem:[#allocation7 + $0x138] sm:$0xff]
    %v1769 = vld [vmem:[#allocation7 + $0x140] sm:$0xff]
    %v1770 = vld [vmem:[#allocation7 + $0x148] sm:$0xff]
    %v1771 = vld [vmem:[#allocation7 + $0x150] sm:$0xff]
    %v1772 = vld [vmem:[#allocation7 + $0x158] sm:$0xff]
    %v1773 = vld [vmem:[#allocation7 + $0x160] sm:$0xff]
    %v1774 = vld [vmem:[#allocation7 + $0x168] sm:$0xff]
    %v1775 = vld [vmem:[#allocation7 + $0x170] sm:$0xff]
    %v1776 = vld [vmem:[#allocation7 + $0x178] sm:$0xff]
    %v1777 = vld [vmem:[#allocation7 + $0x180] sm:$0xff]
    %v1778 = vld [vmem:[#allocation7 + $0x188] sm:$0xff]
    %v1779 = vld [vmem:[#allocation7 + $0x190] sm:$0xff]
    %v1780 = vld [vmem:[#allocation7 + $0x198] sm:$0xff]
    %v1781 = vld [vmem:[#allocation7 + $0x1a0] sm:$0xff]
    %v1782 = vld [vmem:[#allocation7 + $0x1a8] sm:$0xff]
    %v1783 = vld [vmem:[#allocation7 + $0x1b0] sm:$0xff]
    %v1784 = vld [vmem:[#allocation7 + $0x1b8] sm:$0xff]
    %v1785 = vld [vmem:[#allocation7 + $0x1c0] sm:$0xff]
    %v1786 = vld [vmem:[#allocation7 + $0x1c8] sm:$0xff]
    %v1787 = vld [vmem:[#allocation7 + $0x1d0] sm:$0xff]
    %v1788 = vld [vmem:[#allocation7 + $0x1d8] sm:$0xff]
    %v1789 = vld [vmem:[#allocation7 + $0x1e0] sm:$0xff]
    %v1790 = vld [vmem:[#allocation7 + $0x1e8] sm:$0xff]
    %v1791 = vld [vmem:[#allocation7 + $0x1f0] sm:$0xff]
    %v1792 = vld [vmem:[#allocation7 + $0x1f8] sm:$0xff]
    %v1793 = vld [vmem:[%s5] sm:$0x3]
    %v1795 = vlaneseq
    %v1796 = vshrl.u32 %v1795, 7
    %v1797 = vsub.s32 0, %v1796
    %v1798 = vrot.slane %v1793, %v1797
    %v1799 = vlaneseq
    %v1800 = vshrl.u32 %v1799, 7
    %v1801 = vsub.s32 1, %v1800
    %v1802 = vrot.slane %v1793, %v1801
    %v1869 = vunpack.c.l.b16 %v1729
    %v1870 = vunpack.c.h.b16 %v1729
    %v1871 = vunpack.c.l.b16 %v1730
    %v1872 = vunpack.c.h.b16 %v1730
    %v1873 = vunpack.c.l.b16 %v1731
    %v1874 = vunpack.c.h.b16 %v1731
    %v1875 = vunpack.c.l.b16 %v1732
    %v1876 = vunpack.c.h.b16 %v1732
    %v1877 = vunpack.c.l.b16 %v1733
    %v1878 = vunpack.c.h.b16 %v1733
    %v1879 = vunpack.c.l.b16 %v1734
    %v1880 = vunpack.c.h.b16 %v1734
    %v1881 = vunpack.c.l.b16 %v1735
    %v1882 = vunpack.c.h.b16 %v1735
    %v1883 = vunpack.c.l.b16 %v1736
    %v1884 = vunpack.c.h.b16 %v1736
    %v1885 = vunpack.c.l.b16 %v1737
    %v1886 = vunpack.c.h.b16 %v1737
    %v1887 = vunpack.c.l.b16 %v1738
    %v1888 = vunpack.c.h.b16 %v1738
    %v1889 = vunpack.c.l.b16 %v1739
    %v1890 = vunpack.c.h.b16 %v1739
    %v1891 = vunpack.c.l.b16 %v1740
    %v1892 = vunpack.c.h.b16 %v1740
    %v1893 = vunpack.c.l.b16 %v1741
    %v1894 = vunpack.c.h.b16 %v1741
    %v1895 = vunpack.c.l.b16 %v1742
    %v1896 = vunpack.c.h.b16 %v1742
    %v1897 = vunpack.c.l.b16 %v1743
    %v1898 = vunpack.c.h.b16 %v1743
    %v1899 = vunpack.c.l.b16 %v1744
    %v1900 = vunpack.c.h.b16 %v1744
    %v1901 = vunpack.c.l.b16 %v1745
    %v1902 = vunpack.c.h.b16 %v1745
    %v1903 = vunpack.c.l.b16 %v1746
    %v1904 = vunpack.c.h.b16 %v1746
    %v1905 = vunpack.c.l.b16 %v1747
    %v1906 = vunpack.c.h.b16 %v1747
    %v1907 = vunpack.c.l.b16 %v1748
    %v1908 = vunpack.c.h.b16 %v1748
    %v1909 = vunpack.c.l.b16 %v1749
    %v1910 = vunpack.c.h.b16 %v1749
    %v1911 = vunpack.c.l.b16 %v1750
    %v1912 = vunpack.c.h.b16 %v1750
    %v1913 = vunpack.c.l.b16 %v1751
    %v1914 = vunpack.c.h.b16 %v1751
    %v1915 = vunpack.c.l.b16 %v1752
    %v1916 = vunpack.c.h.b16 %v1752
    %v1917 = vunpack.c.l.b16 %v1753
    %v1918 = vunpack.c.h.b16 %v1753
    %v1919 = vunpack.c.l.b16 %v1754
    %v1920 = vunpack.c.h.b16 %v1754
    %v1921 = vunpack.c.l.b16 %v1755
    %v1922 = vunpack.c.h.b16 %v1755
    %v1923 = vunpack.c.l.b16 %v1756
    %v1924 = vunpack.c.h.b16 %v1756
    %v1925 = vunpack.c.l.b16 %v1757
    %v1926 = vunpack.c.h.b16 %v1757
    %v1927 = vunpack.c.l.b16 %v1758
    %v1928 = vunpack.c.h.b16 %v1758
    %v1929 = vunpack.c.l.b16 %v1759
    %v1930 = vunpack.c.h.b16 %v1759
    %v1931 = vunpack.c.l.b16 %v1760
    %v1932 = vunpack.c.h.b16 %v1760
    %v1933 = vunpack.c.l.b16 %v1761
    %v1934 = vunpack.c.h.b16 %v1761
    %v1935 = vunpack.c.l.b16 %v1762
    %v1936 = vunpack.c.h.b16 %v1762
    %v1937 = vunpack.c.l.b16 %v1763
    %v1938 = vunpack.c.h.b16 %v1763
    %v1939 = vunpack.c.l.b16 %v1764
    %v1940 = vunpack.c.h.b16 %v1764
    %v1941 = vunpack.c.l.b16 %v1765
    %v1942 = vunpack.c.h.b16 %v1765
    %v1943 = vunpack.c.l.b16 %v1766
    %v1944 = vunpack.c.h.b16 %v1766
    %v1945 = vunpack.c.l.b16 %v1767
    %v1946 = vunpack.c.h.b16 %v1767
    %v1947 = vunpack.c.l.b16 %v1768
    %v1948 = vunpack.c.h.b16 %v1768
    %v1949 = vunpack.c.l.b16 %v1769
    %v1950 = vunpack.c.h.b16 %v1769
    %v1951 = vunpack.c.l.b16 %v1770
    %v1952 = vunpack.c.h.b16 %v1770
    %v1953 = vunpack.c.l.b16 %v1771
    %v1954 = vunpack.c.h.b16 %v1771
    %v1955 = vunpack.c.l.b16 %v1772
    %v1956 = vunpack.c.h.b16 %v1772
    %v1957 = vunpack.c.l.b16 %v1773
    %v1958 = vunpack.c.h.b16 %v1773
    %v1959 = vunpack.c.l.b16 %v1774
    %v1960 = vunpack.c.h.b16 %v1774
    %v1961 = vunpack.c.l.b16 %v1775
    %v1962 = vunpack.c.h.b16 %v1775
    %v1963 = vunpack.c.l.b16 %v1776
    %v1964 = vunpack.c.h.b16 %v1776
    %v1965 = vunpack.c.l.b16 %v1777
    %v1966 = vunpack.c.h.b16 %v1777
    %v1967 = vunpack.c.l.b16 %v1778
    %v1968 = vunpack.c.h.b16 %v1778
    %v1969 = vunpack.c.l.b16 %v1779
    %v1970 = vunpack.c.h.b16 %v1779
    %v1971 = vunpack.c.l.b16 %v1780
    %v1972 = vunpack.c.h.b16 %v1780
    %v1973 = vunpack.c.l.b16 %v1781
    %v1974 = vunpack.c.h.b16 %v1781
    %v1975 = vunpack.c.l.b16 %v1782
    %v1976 = vunpack.c.h.b16 %v1782
    %v1977 = vunpack.c.l.b16 %v1783
    %v1978 = vunpack.c.h.b16 %v1783
    %v1979 = vunpack.c.l.b16 %v1784
    %v1980 = vunpack.c.h.b16 %v1784
    %v1981 = vunpack.c.l.b16 %v1785
    %v1982 = vunpack.c.h.b16 %v1785
    %v1983 = vunpack.c.l.b16 %v1786
    %v1984 = vunpack.c.h.b16 %v1786
    %v1985 = vunpack.c.l.b16 %v1787
    %v1986 = vunpack.c.h.b16 %v1787
    %v1987 = vunpack.c.l.b16 %v1788
    %v1988 = vunpack.c.h.b16 %v1788
    %v1989 = vunpack.c.l.b16 %v1789
    %v1990 = vunpack.c.h.b16 %v1789
    %v1991 = vunpack.c.l.b16 %v1790
    %v1992 = vunpack.c.h.b16 %v1790
    %v1993 = vunpack.c.l.b16 %v1791
    %v1994 = vunpack.c.h.b16 %v1791
    %v1995 = vunpack.c.l.b16 %v1792
    %v1996 = vunpack.c.h.b16 %v1792
    %v1997 = vpack.c.b16 %v1871, %v1869
    %v1998 = vpack.c.b16 %v1872, %v1870
    %v1999 = vpack.c.b16 %v1875, %v1873
    %v2000 = vpack.c.b16 %v1876, %v1874
    %v2001 = vpack.c.b16 %v1879, %v1877
    %v2002 = vpack.c.b16 %v1880, %v1878
    %v2003 = vpack.c.b16 %v1883, %v1881
    %v2004 = vpack.c.b16 %v1884, %v1882
    %v2005 = vpack.c.b16 %v1887, %v1885
    %v2006 = vpack.c.b16 %v1888, %v1886
    %v2007 = vpack.c.b16 %v1891, %v1889
    %v2008 = vpack.c.b16 %v1892, %v1890
    %v2009 = vpack.c.b16 %v1895, %v1893
    %v2010 = vpack.c.b16 %v1896, %v1894
    %v2011 = vpack.c.b16 %v1899, %v1897
    %v2012 = vpack.c.b16 %v1900, %v1898
    %v2013 = vpack.c.b16 %v1903, %v1901
    %v2014 = vpack.c.b16 %v1904, %v1902
    %v2015 = vpack.c.b16 %v1907, %v1905
    %v2016 = vpack.c.b16 %v1908, %v1906
    %v2017 = vpack.c.b16 %v1911, %v1909
    %v2018 = vpack.c.b16 %v1912, %v1910
    %v2019 = vpack.c.b16 %v1915, %v1913
    %v2020 = vpack.c.b16 %v1916, %v1914
    %v2021 = vpack.c.b16 %v1919, %v1917
    %v2022 = vpack.c.b16 %v1920, %v1918
    %v2023 = vpack.c.b16 %v1923, %v1921
    %v2024 = vpack.c.b16 %v1924, %v1922
    %v2025 = vpack.c.b16 %v1927, %v1925
    %v2026 = vpack.c.b16 %v1928, %v1926
    %v2027 = vpack.c.b16 %v1931, %v1929
    %v2028 = vpack.c.b16 %v1932, %v1930
    %v2029 = vpack.c.b16 %v1935, %v1933
    %v2030 = vpack.c.b16 %v1936, %v1934
    %v2031 = vpack.c.b16 %v1939, %v1937
    %v2032 = vpack.c.b16 %v1940, %v1938
    %v2033 = vpack.c.b16 %v1943, %v1941
    %v2034 = vpack.c.b16 %v1944, %v1942
    %v2035 = vpack.c.b16 %v1947, %v1945
    %v2036 = vpack.c.b16 %v1948, %v1946
    %v2037 = vpack.c.b16 %v1951, %v1949
    %v2038 = vpack.c.b16 %v1952, %v1950
    %v2039 = vpack.c.b16 %v1955, %v1953
    %v2040 = vpack.c.b16 %v1956, %v1954
    %v2041 = vpack.c.b16 %v1959, %v1957
    %v2042 = vpack.c.b16 %v1960, %v1958
    %v2043 = vpack.c.b16 %v1963, %v1961
    %v2044 = vpack.c.b16 %v1964, %v1962
    %v2045 = vpack.c.b16 %v1967, %v1965
    %v2046 = vpack.c.b16 %v1968, %v1966
    %v2047 = vpack.c.b16 %v1971, %v1969
    %v2048 = vpack.c.b16 %v1972, %v1970
    %v2049 = vpack.c.b16 %v1975, %v1973
    %v2050 = vpack.c.b16 %v1976, %v1974
    %v2051 = vpack.c.b16 %v1979, %v1977
    %v2052 = vpack.c.b16 %v1980, %v1978
    %v2053 = vpack.c.b16 %v1983, %v1981
    %v2054 = vpack.c.b16 %v1984, %v1982
    %v2055 = vpack.c.b16 %v1987, %v1985
    %v2056 = vpack.c.b16 %v1988, %v1986
    %v2057 = vpack.c.b16 %v1991, %v1989
    %v2058 = vpack.c.b16 %v1992, %v1990
    %v2059 = vpack.c.b16 %v1995, %v1993
    %v2060 = vpack.c.b16 %v1996, %v1994
    %2125 = vmatprep.subr.bf16.mxu0 %v2012
    %2126 = vmatpush1.bf16.msra.mxu0 %v2011
    %2127 = vmatprep.subr.bf16.mxu0 %v2010
    %2128 = vmatpush1.bf16.msra.mxu0 %v2009
    %2129 = vmatprep.subr.bf16.mxu0 %v2008
    %2130 = vmatpush1.bf16.msra.mxu0 %v2007
    %2131 = vmatprep.subr.bf16.mxu0 %v2006
    %2132 = vmatpush1.bf16.msra.mxu0 %v2005
    %2133 = vmatprep.subr.bf16.mxu0 %v2004
    %2134 = vmatpush1.bf16.msra.mxu0 %v2003
    %2135 = vmatprep.subr.bf16.mxu0 %v2002
    %2136 = vmatpush1.bf16.msra.mxu0 %v2001
    %2137 = vmatprep.subr.bf16.mxu0 %v2000
    %2138 = vmatpush1.bf16.msra.mxu0 %v1999
    %2139 = vmatprep.subr.bf16.mxu0 %v1998
    %2140 = vmatpush1.bf16.msra.mxu0 %v1997
    %2141 = vmatprep.subr.bf16.mxu0 %v2028
    %2142 = vmatpush2.bf16.msra.mxu0 %v2027
    %2143 = vmatprep.subr.bf16.mxu0 %v2026
    %2144 = vmatpush2.bf16.msra.mxu0 %v2025
    %2145 = vmatprep.subr.bf16.mxu0 %v2024
    %2146 = vmatpush2.bf16.msra.mxu0 %v2023
    %2147 = vmatprep.subr.bf16.mxu0 %v2022
    %2148 = vmatpush2.bf16.msra.mxu0 %v2021
    %2149 = vmatprep.subr.bf16.mxu0 %v2020
    %2150 = vmatpush2.bf16.msra.mxu0 %v2019
    %2151 = vmatprep.subr.bf16.mxu0 %v2018
    %2152 = vmatpush2.bf16.msra.mxu0 %v2017
    %2153 = vmatprep.subr.bf16.mxu0 %v2016
    %2154 = vmatpush2.bf16.msra.mxu0 %v2015
    %2155 = vmatprep.subr.bf16.mxu0 %v2014
    %2156 = vmatpush2.bf16.msra.mxu0 %v2013
    %2157 = vmatprep.mubr.bf16.mxu0 %v1726
    %2158 = vmatmul.mubr.bf16.gmra.mxu0 %v1725
    %v2159 = vpop.f32.mrf.mxu0
    %v2160 = vadd.f32 %v1798, %v2159
    %v2161 = vpop.f32.mrf.mxu0
    %v2162 = vadd.f32 %v1802, %v2161
    %v2163 = vpop.f32.mrf.mxu0
    %v2164 = vadd.f32 %v1798, %v2163
    %v2165 = vpop.f32.mrf.mxu0
    %v2166 = vadd.f32 %v1802, %v2165
    %2167 = vdwg.mxu0
    %2168 = vmatprep.subr.bf16.mxu0 %v2044
    %2169 = vmatpush1.bf16.msra.mxu0 %v2043
    %2170 = vmatprep.subr.bf16.mxu0 %v2042
    %2171 = vmatpush1.bf16.msra.mxu0 %v2041
    %2172 = vmatprep.subr.bf16.mxu0 %v2040
    %2173 = vmatpush1.bf16.msra.mxu0 %v2039
    %2174 = vmatprep.subr.bf16.mxu0 %v2038
    %2175 = vmatpush1.bf16.msra.mxu0 %v2037
    %2176 = vmatprep.subr.bf16.mxu0 %v2036
    %2177 = vmatpush1.bf16.msra.mxu0 %v2035
    %2178 = vmatprep.subr.bf16.mxu0 %v2034
    %2179 = vmatpush1.bf16.msra.mxu0 %v2033
    %2180 = vmatprep.subr.bf16.mxu0 %v2032
    %2181 = vmatpush1.bf16.msra.mxu0 %v2031
    %2182 = vmatprep.subr.bf16.mxu0 %v2030
    %2183 = vmatpush1.bf16.msra.mxu0 %v2029
    %2184 = vmatprep.subr.bf16.mxu0 %v2060
    %2185 = vmatpush2.bf16.msra.mxu0 %v2059
    %2186 = vmatprep.subr.bf16.mxu0 %v2058
    %2187 = vmatpush2.bf16.msra.mxu0 %v2057
    %2188 = vmatprep.subr.bf16.mxu0 %v2056
    %2189 = vmatpush2.bf16.msra.mxu0 %v2055
    %2190 = vmatprep.subr.bf16.mxu0 %v2054
    %2191 = vmatpush2.bf16.msra.mxu0 %v2053
    %2192 = vmatprep.subr.bf16.mxu0 %v2052
    %2193 = vmatpush2.bf16.msra.mxu0 %v2051
    %2194 = vmatprep.subr.bf16.mxu0 %v2050
    %2195 = vmatpush2.bf16.msra.mxu0 %v2049
    %2196 = vmatprep.subr.bf16.mxu0 %v2048
    %2197 = vmatpush2.bf16.msra.mxu0 %v2047
    %2198 = vmatprep.subr.bf16.mxu0 %v2046
    %2199 = vmatpush2.bf16.msra.mxu0 %v2045
    %2200 = vmatprep.mubr.bf16.mxu0 %v1728
    %2201 = vmatmul.mubr.bf16.gmra.mxu0 %v1727
    %v2202 = vpop.f32.mrf.mxu0
    %v2203 = vadd.f32 %v2160, %v2202
    %v2204 = vpop.f32.mrf.mxu0
    %v2205 = vadd.f32 %v2162, %v2204
    %v2206 = vpop.f32.mrf.mxu0
    %v2207 = vadd.f32 %v2164, %v2206
    %v2208 = vpop.f32.mrf.mxu0
    %v2209 = vadd.f32 %v2166, %v2208
    %2210 = vdwg.mxu0
    %v2211 = vmax.f32 %v2203, 0.0
    %v2212 = vmax.f32 %v2205, 0.0
    %v2213 = vmax.f32 %v2207, 0.0
    %v2214 = vmax.f32 %v2209, 0.0
    %v2215 = vpack.c.bf16 %v2213, %v2211
    %v2216 = vpack.c.bf16 %v2214, %v2212
    %v2217 = vld [vmem:[#allocation8] sm:$0xff]
    %v2218 = vld [vmem:[#allocation8 + $0x8] sm:$0xff]
    %v2219 = vld [vmem:[#allocation8 + $0x10] sm:$0xff]
    %v2220 = vld [vmem:[#allocation8 + $0x18] sm:$0xff]
    %v2221 = vld [vmem:[#allocation8 + $0x20] sm:$0xff]
    %v2222 = vld [vmem:[#allocation8 + $0x28] sm:$0xff]
    %v2223 = vld [vmem:[#allocation8 + $0x30] sm:$0xff]
    %v2224 = vld [vmem:[#allocation8 + $0x38] sm:$0xff]
    %v2225 = vld [vmem:[#allocation8 + $0x40] sm:$0xff]
    %v2226 = vld [vmem:[#allocation8 + $0x48] sm:$0xff]
    %v2227 = vld [vmem:[#allocation8 + $0x50] sm:$0xff]
    %v2228 = vld [vmem:[#allocation8 + $0x58] sm:$0xff]
    %v2229 = vld [vmem:[#allocation8 + $0x60] sm:$0xff]
    %v2230 = vld [vmem:[#allocation8 + $0x68] sm:$0xff]
    %v2231 = vld [vmem:[#allocation8 + $0x70] sm:$0xff]
    %v2232 = vld [vmem:[#allocation8 + $0x78] sm:$0xff]
    %v2233 = vld [vmem:[#allocation8 + $0x80] sm:$0xff]
    %v2234 = vld [vmem:[#allocation8 + $0x88] sm:$0xff]
    %v2235 = vld [vmem:[#allocation8 + $0x90] sm:$0xff]
    %v2236 = vld [vmem:[#allocation8 + $0x98] sm:$0xff]
    %v2237 = vld [vmem:[#allocation8 + $0xa0] sm:$0xff]
    %v2238 = vld [vmem:[#allocation8 + $0xa8] sm:$0xff]
    %v2239 = vld [vmem:[#allocation8 + $0xb0] sm:$0xff]
    %v2240 = vld [vmem:[#allocation8 + $0xb8] sm:$0xff]
    %v2241 = vld [vmem:[#allocation8 + $0xc0] sm:$0xff]
    %v2242 = vld [vmem:[#allocation8 + $0xc8] sm:$0xff]
    %v2243 = vld [vmem:[#allocation8 + $0xd0] sm:$0xff]
    %v2244 = vld [vmem:[#allocation8 + $0xd8] sm:$0xff]
    %v2245 = vld [vmem:[#allocation8 + $0xe0] sm:$0xff]
    %v2246 = vld [vmem:[#allocation8 + $0xe8] sm:$0xff]
    %v2247 = vld [vmem:[#allocation8 + $0xf0] sm:$0xff]
    %v2248 = vld [vmem:[#allocation8 + $0xf8] sm:$0xff]
    %v2249 = vld [vmem:[%s7] sm:$0x3]
    %v2251 = vlaneseq
    %v2252 = vshrl.u32 %v2251, 7
    %v2253 = vsub.s32 0, %v2252
    %v2254 = vrot.slane %v2249, %v2253
    %v2255 = vlaneseq
    %v2256 = vshrl.u32 %v2255, 7
    %v2257 = vsub.s32 1, %v2256
    %v2258 = vrot.slane %v2249, %v2257
    %v2293 = vunpack.c.l.b16 %v2217
    %v2294 = vunpack.c.h.b16 %v2217
    %v2295 = vunpack.c.l.b16 %v2218
    %v2296 = vunpack.c.h.b16 %v2218
    %v2297 = vunpack.c.l.b16 %v2219
    %v2298 = vunpack.c.h.b16 %v2219
    %v2299 = vunpack.c.l.b16 %v2220
    %v2300 = vunpack.c.h.b16 %v2220
    %v2301 = vunpack.c.l.b16 %v2221
    %v2302 = vunpack.c.h.b16 %v2221
    %v2303 = vunpack.c.l.b16 %v2222
    %v2304 = vunpack.c.h.b16 %v2222
    %v2305 = vunpack.c.l.b16 %v2223
    %v2306 = vunpack.c.h.b16 %v2223
    %v2307 = vunpack.c.l.b16 %v2224
    %v2308 = vunpack.c.h.b16 %v2224
    %v2309 = vunpack.c.l.b16 %v2225
    %v2310 = vunpack.c.h.b16 %v2225
    %v2311 = vunpack.c.l.b16 %v2226
    %v2312 = vunpack.c.h.b16 %v2226
    %v2313 = vunpack.c.l.b16 %v2227
    %v2314 = vunpack.c.h.b16 %v2227
    %v2315 = vunpack.c.l.b16 %v2228
    %v2316 = vunpack.c.h.b16 %v2228
    %v2317 = vunpack.c.l.b16 %v2229
    %v2318 = vunpack.c.h.b16 %v2229
    %v2319 = vunpack.c.l.b16 %v2230
    %v2320 = vunpack.c.h.b16 %v2230
    %v2321 = vunpack.c.l.b16 %v2231
    %v2322 = vunpack.c.h.b16 %v2231
    %v2323 = vunpack.c.l.b16 %v2232
    %v2324 = vunpack.c.h.b16 %v2232
    %v2325 = vunpack.c.l.b16 %v2233
    %v2326 = vunpack.c.h.b16 %v2233
    %v2327 = vunpack.c.l.b16 %v2234
    %v2328 = vunpack.c.h.b16 %v2234
    %v2329 = vunpack.c.l.b16 %v2235
    %v2330 = vunpack.c.h.b16 %v2235
    %v2331 = vunpack.c.l.b16 %v2236
    %v2332 = vunpack.c.h.b16 %v2236
    %v2333 = vunpack.c.l.b16 %v2237
    %v2334 = vunpack.c.h.b16 %v2237
    %v2335 = vunpack.c.l.b16 %v2238
    %v2336 = vunpack.c.h.b16 %v2238
    %v2337 = vunpack.c.l.b16 %v2239
    %v2338 = vunpack.c.h.b16 %v2239
    %v2339 = vunpack.c.l.b16 %v2240
    %v2340 = vunpack.c.h.b16 %v2240
    %v2341 = vunpack.c.l.b16 %v2241
    %v2342 = vunpack.c.h.b16 %v2241
    %v2343 = vunpack.c.l.b16 %v2242
    %v2344 = vunpack.c.h.b16 %v2242
    %v2345 = vunpack.c.l.b16 %v2243
    %v2346 = vunpack.c.h.b16 %v2243
    %v2347 = vunpack.c.l.b16 %v2244
    %v2348 = vunpack.c.h.b16 %v2244
    %v2349 = vunpack.c.l.b16 %v2245
    %v2350 = vunpack.c.h.b16 %v2245
    %v2351 = vunpack.c.l.b16 %v2246
    %v2352 = vunpack.c.h.b16 %v2246
    %v2353 = vunpack.c.l.b16 %v2247
    %v2354 = vunpack.c.h.b16 %v2247
    %v2355 = vunpack.c.l.b16 %v2248
    %v2356 = vunpack.c.h.b16 %v2248
    %v2357 = vpack.c.b16 %v2295, %v2293
    %v2358 = vpack.c.b16 %v2296, %v2294
    %v2359 = vpack.c.b16 %v2299, %v2297
    %v2360 = vpack.c.b16 %v2300, %v2298
    %v2361 = vpack.c.b16 %v2303, %v2301
    %v2362 = vpack.c.b16 %v2304, %v2302
    %v2363 = vpack.c.b16 %v2307, %v2305
    %v2364 = vpack.c.b16 %v2308, %v2306
    %v2365 = vpack.c.b16 %v2311, %v2309
    %v2366 = vpack.c.b16 %v2312, %v2310
    %v2367 = vpack.c.b16 %v2315, %v2313
    %v2368 = vpack.c.b16 %v2316, %v2314
    %v2369 = vpack.c.b16 %v2319, %v2317
    %v2370 = vpack.c.b16 %v2320, %v2318
    %v2371 = vpack.c.b16 %v2323, %v2321
    %v2372 = vpack.c.b16 %v2324, %v2322
    %v2373 = vpack.c.b16 %v2327, %v2325
    %v2374 = vpack.c.b16 %v2328, %v2326
    %v2375 = vpack.c.b16 %v2331, %v2329
    %v2376 = vpack.c.b16 %v2332, %v2330
    %v2377 = vpack.c.b16 %v2335, %v2333
    %v2378 = vpack.c.b16 %v2336, %v2334
    %v2379 = vpack.c.b16 %v2339, %v2337
    %v2380 = vpack.c.b16 %v2340, %v2338
    %v2381 = vpack.c.b16 %v2343, %v2341
    %v2382 = vpack.c.b16 %v2344, %v2342
    %v2383 = vpack.c.b16 %v2347, %v2345
    %v2384 = vpack.c.b16 %v2348, %v2346
    %v2385 = vpack.c.b16 %v2351, %v2349
    %v2386 = vpack.c.b16 %v2352, %v2350
    %v2387 = vpack.c.b16 %v2355, %v2353
    %v2388 = vpack.c.b16 %v2356, %v2354
    %2421 = vmatprep.subr.bf16.mxu0 %v2372
    %2422 = vmatpush1.bf16.msra.mxu0 %v2371
    %2423 = vmatprep.subr.bf16.mxu0 %v2370
    %2424 = vmatpush1.bf16.msra.mxu0 %v2369
    %2425 = vmatprep.subr.bf16.mxu0 %v2368
    %2426 = vmatpush1.bf16.msra.mxu0 %v2367
    %2427 = vmatprep.subr.bf16.mxu0 %v2366
    %2428 = vmatpush1.bf16.msra.mxu0 %v2365
    %2429 = vmatprep.subr.bf16.mxu0 %v2364
    %2430 = vmatpush1.bf16.msra.mxu0 %v2363
    %2431 = vmatprep.subr.bf16.mxu0 %v2362
    %2432 = vmatpush1.bf16.msra.mxu0 %v2361
    %2433 = vmatprep.subr.bf16.mxu0 %v2360
    %2434 = vmatpush1.bf16.msra.mxu0 %v2359
    %2435 = vmatprep.subr.bf16.mxu0 %v2358
    %2436 = vmatpush1.bf16.msra.mxu0 %v2357
    %2437 = vmatprep.subr.bf16.mxu0 %v2388
    %2438 = vmatpush2.bf16.msra.mxu0 %v2387
    %2439 = vmatprep.subr.bf16.mxu0 %v2386
    %2440 = vmatpush2.bf16.msra.mxu0 %v2385
    %2441 = vmatprep.subr.bf16.mxu0 %v2384
    %2442 = vmatpush2.bf16.msra.mxu0 %v2383
    %2443 = vmatprep.subr.bf16.mxu0 %v2382
    %2444 = vmatpush2.bf16.msra.mxu0 %v2381
    %2445 = vmatprep.subr.bf16.mxu0 %v2380
    %2446 = vmatpush2.bf16.msra.mxu0 %v2379
    %2447 = vmatprep.subr.bf16.mxu0 %v2378
    %2448 = vmatpush2.bf16.msra.mxu0 %v2377
    %2449 = vmatprep.subr.bf16.mxu0 %v2376
    %2450 = vmatpush2.bf16.msra.mxu0 %v2375
    %2451 = vmatprep.subr.bf16.mxu0 %v2374
    %2452 = vmatpush2.bf16.msra.mxu0 %v2373
    %2453 = vmatprep.mubr.bf16.mxu0 %v2216
    %2454 = vmatmul.mubr.bf16.gmra.mxu0 %v2215
    %v2455 = vpop.f32.mrf.mxu0
    %v2456 = vadd.f32 %v2254, %v2455
    %v2457 = vpop.f32.mrf.mxu0
    %v2458 = vadd.f32 %v2258, %v2457
    %v2459 = vpop.f32.mrf.mxu0
    %v2460 = vadd.f32 %v2254, %v2459
    %v2461 = vpop.f32.mrf.mxu0
    %v2462 = vadd.f32 %v2258, %v2461
    %2463 = vdwg.mxu0
    %v2464 = vmax.f32 %v2456, 0.0
    %v2465 = vmax.f32 %v2458, 0.0
    %v2466 = vmax.f32 %v2460, 0.0
    %v2467 = vmax.f32 %v2462, 0.0
    %v2468 = vpack.c.bf16 %v2466, %v2464
    %v2469 = vpack.c.bf16 %v2467, %v2465
    %v2470 = vld [vmem:[#allocation10] sm:$0xf]
    %v2471 = vld [vmem:[#allocation10 + $0x4] sm:$0xf]
    %v2472 = vld [vmem:[#allocation10 + $0x8] sm:$0xf]
    %v2473 = vld [vmem:[#allocation10 + $0xc] sm:$0xf]
    %v2474 = vld [vmem:[#allocation10 + $0x10] sm:$0xf]
    %v2475 = vld [vmem:[#allocation10 + $0x14] sm:$0xf]
    %v2476 = vld [vmem:[#allocation10 + $0x18] sm:$0xf]
    %v2477 = vld [vmem:[#allocation10 + $0x1c] sm:$0xf]
    %v2478 = vld [vmem:[#allocation10 + $0x20] sm:$0xf]
    %v2479 = vld [vmem:[#allocation10 + $0x24] sm:$0xf]
    %v2480 = vld [vmem:[#allocation10 + $0x28] sm:$0xf]
    %v2481 = vld [vmem:[#allocation10 + $0x2c] sm:$0xf]
    %v2482 = vld [vmem:[#allocation10 + $0x30] sm:$0xf]
    %v2483 = vld [vmem:[#allocation10 + $0x34] sm:$0xf]
    %v2484 = vld [vmem:[#allocation10 + $0x38] sm:$0xf]
    %v2485 = vld [vmem:[#allocation10 + $0x3c] sm:$0xf]
    %v2486 = vld [vmem:[#allocation10 + $0x40] sm:$0xf]
    %v2487 = vld [vmem:[#allocation10 + $0x44] sm:$0xf]
    %v2488 = vld [vmem:[#allocation10 + $0x48] sm:$0xf]
    %v2489 = vld [vmem:[#allocation10 + $0x4c] sm:$0xf]
    %v2490 = vld [vmem:[#allocation10 + $0x50] sm:$0xf]
    %v2491 = vld [vmem:[#allocation10 + $0x54] sm:$0xf]
    %v2492 = vld [vmem:[#allocation10 + $0x58] sm:$0xf]
    %v2493 = vld [vmem:[#allocation10 + $0x5c] sm:$0xf]
    %v2494 = vld [vmem:[#allocation10 + $0x60] sm:$0xf]
    %v2495 = vld [vmem:[#allocation10 + $0x64] sm:$0xf]
    %v2496 = vld [vmem:[#allocation10 + $0x68] sm:$0xf]
    %v2497 = vld [vmem:[#allocation10 + $0x6c] sm:$0xf]
    %v2498 = vld [vmem:[#allocation10 + $0x70] sm:$0xf]
    %v2499 = vld [vmem:[#allocation10 + $0x74] sm:$0xf]
    %v2500 = vld [vmem:[#allocation10 + $0x78] sm:$0xf]
    %v2501 = vld [vmem:[#allocation10 + $0x7c] sm:$0xf]
    %v2502 = vld [vmem:[%s9] sm:$0x1]
    %v2504 = vlaneseq
    %v2505 = vshrl.u32 %v2504, 7
    %v2506 = vsub.s32 0, %v2505
    %v2507 = vrot.slane %v2502, %v2506
    %v2541 = vunpack.c.l.b16 %v2470
    %v2542 = vunpack.c.l.b16 %v2471
    %v2543 = vunpack.c.l.b16 %v2472
    %v2544 = vunpack.c.l.b16 %v2473
    %v2545 = vunpack.c.l.b16 %v2474
    %v2546 = vunpack.c.l.b16 %v2475
    %v2547 = vunpack.c.l.b16 %v2476
    %v2548 = vunpack.c.l.b16 %v2477
    %v2549 = vunpack.c.l.b16 %v2478
    %v2550 = vunpack.c.l.b16 %v2479
    %v2551 = vunpack.c.l.b16 %v2480
    %v2552 = vunpack.c.l.b16 %v2481
    %v2553 = vunpack.c.l.b16 %v2482
    %v2554 = vunpack.c.l.b16 %v2483
    %v2555 = vunpack.c.l.b16 %v2484
    %v2556 = vunpack.c.l.b16 %v2485
    %v2557 = vunpack.c.l.b16 %v2486
    %v2558 = vunpack.c.l.b16 %v2487
    %v2559 = vunpack.c.l.b16 %v2488
    %v2560 = vunpack.c.l.b16 %v2489
    %v2561 = vunpack.c.l.b16 %v2490
    %v2562 = vunpack.c.l.b16 %v2491
    %v2563 = vunpack.c.l.b16 %v2492
    %v2564 = vunpack.c.l.b16 %v2493
    %v2565 = vunpack.c.l.b16 %v2494
    %v2566 = vunpack.c.l.b16 %v2495
    %v2567 = vunpack.c.l.b16 %v2496
    %v2568 = vunpack.c.l.b16 %v2497
    %v2569 = vunpack.c.l.b16 %v2498
    %v2570 = vunpack.c.l.b16 %v2499
    %v2571 = vunpack.c.l.b16 %v2500
    %v2572 = vunpack.c.l.b16 %v2501
    %v2573 = vpack.c.b16 %v2542, %v2541
    %v2574 = vpack.c.b16 %v2544, %v2543
    %v2575 = vpack.c.b16 %v2546, %v2545
    %v2576 = vpack.c.b16 %v2548, %v2547
    %v2577 = vpack.c.b16 %v2550, %v2549
    %v2578 = vpack.c.b16 %v2552, %v2551
    %v2579 = vpack.c.b16 %v2554, %v2553
    %v2580 = vpack.c.b16 %v2556, %v2555
    %v2581 = vpack.c.b16 %v2558, %v2557
    %v2582 = vpack.c.b16 %v2560, %v2559
    %v2583 = vpack.c.b16 %v2562, %v2561
    %v2584 = vpack.c.b16 %v2564, %v2563
    %v2585 = vpack.c.b16 %v2566, %v2565
    %v2586 = vpack.c.b16 %v2568, %v2567
    %v2587 = vpack.c.b16 %v2570, %v2569
    %v2588 = vpack.c.b16 %v2572, %v2571
    %2605 = vmatprep.subr.bf16.mxu0 0
    %2606 = vmatpush1.bf16.msra.mxu0 %v2580
    %2607 = vmatprep.subr.bf16.mxu0 0
    %2608 = vmatpush1.bf16.msra.mxu0 %v2579
    %2609 = vmatprep.subr.bf16.mxu0 0
    %2610 = vmatpush1.bf16.msra.mxu0 %v2578
    %2611 = vmatprep.subr.bf16.mxu0 0
    %2612 = vmatpush1.bf16.msra.mxu0 %v2577
    %2613 = vmatprep.subr.bf16.mxu0 0
    %2614 = vmatpush1.bf16.msra.mxu0 %v2576
    %2615 = vmatprep.subr.bf16.mxu0 0
    %2616 = vmatpush1.bf16.msra.mxu0 %v2575
    %2617 = vmatprep.subr.bf16.mxu0 0
    %2618 = vmatpush1.bf16.msra.mxu0 %v2574
    %2619 = vmatprep.subr.bf16.mxu0 0
    %2620 = vmatpush1.bf16.msra.mxu0 %v2573
    %2621 = vmatprep.subr.bf16.mxu0 0
    %2622 = vmatpush2.bf16.msra.mxu0 %v2588
    %2623 = vmatprep.subr.bf16.mxu0 0
    %2624 = vmatpush2.bf16.msra.mxu0 %v2587
    %2625 = vmatprep.subr.bf16.mxu0 0
    %2626 = vmatpush2.bf16.msra.mxu0 %v2586
    %2627 = vmatprep.subr.bf16.mxu0 0
    %2628 = vmatpush2.bf16.msra.mxu0 %v2585
    %2629 = vmatprep.subr.bf16.mxu0 0
    %2630 = vmatpush2.bf16.msra.mxu0 %v2584
    %2631 = vmatprep.subr.bf16.mxu0 0
    %2632 = vmatpush2.bf16.msra.mxu0 %v2583
    %2633 = vmatprep.subr.bf16.mxu0 0
    %2634 = vmatpush2.bf16.msra.mxu0 %v2582
    %2635 = vmatprep.subr.bf16.mxu0 0
    %2636 = vmatpush2.bf16.msra.mxu0 %v2581
    %2637 = vmatprep.mubr.bf16.mxu0 %v2469
    %2638 = vmatmul.mubr.bf16.gmra.mxu0 %v2468
    %v2639 = vpop.f32.mrf.mxu0
    %v2640 = vadd.f32 %v2507, %v2639
    %v2641 = vpop.f32.mrf.mxu0
    %v2642 = vpop.f32.mrf.mxu0
    %v2643 = vadd.f32 %v2507, %v2642
    %v2644 = vpop.f32.mrf.mxu0
    %2645 = vdwg.mxu0
    %v2646 = vmax.f32 %v2640, 0.0
    %v2647 = vmax.f32 %v2643, 0.0
    %v2648 = vpack.c.bf16 %v2647, %v2646
    %v2649 = vld [vmem:[#allocation11] sm:$0xf]
    %v2650 = vld [vmem:[#allocation11 + $0x4] sm:$0xf]
    %v2651 = vld [vmem:[#allocation11 + $0x8] sm:$0xf]
    %v2652 = vld [vmem:[#allocation11 + $0xc] sm:$0xf]
    %v2653 = vld [vmem:[#allocation11 + $0x10] sm:$0xf]
    %v2654 = vld [vmem:[#allocation11 + $0x14] sm:$0xf]
    %v2655 = vld [vmem:[#allocation11 + $0x18] sm:$0xf]
    %v2656 = vld [vmem:[#allocation11 + $0x1c] sm:$0xf]
    %v2657 = vld [vmem:[#allocation11 + $0x20] sm:$0xf]
    %v2658 = vld [vmem:[#allocation11 + $0x24] sm:$0xf]
    %v2659 = vld [vmem:[#allocation11 + $0x28] sm:$0xf]
    %v2660 = vld [vmem:[#allocation11 + $0x2c] sm:$0xf]
    %v2661 = vld [vmem:[#allocation11 + $0x30] sm:$0xf]
    %v2662 = vld [vmem:[#allocation11 + $0x34] sm:$0xf]
    %v2663 = vld [vmem:[#allocation11 + $0x38] sm:$0xf]
    %v2664 = vld [vmem:[#allocation11 + $0x3c] sm:$0xf]
    %v2665 = vld [vmem:[%s11] sm:$0x1]
    %v2667 = vlaneseq
    %v2668 = vshrl.u32 %v2667, 7
    %v2669 = vsub.s32 0, %v2668
    %v2670 = vrot.slane %v2665, %v2669
    %v2688 = vunpack.c.l.b16 %v2649
    %v2689 = vunpack.c.l.b16 %v2650
    %v2690 = vunpack.c.l.b16 %v2651
    %v2691 = vunpack.c.l.b16 %v2652
    %v2692 = vunpack.c.l.b16 %v2653
    %v2693 = vunpack.c.l.b16 %v2654
    %v2694 = vunpack.c.l.b16 %v2655
    %v2695 = vunpack.c.l.b16 %v2656
    %v2696 = vunpack.c.l.b16 %v2657
    %v2697 = vunpack.c.l.b16 %v2658
    %v2698 = vunpack.c.l.b16 %v2659
    %v2699 = vunpack.c.l.b16 %v2660
    %v2700 = vunpack.c.l.b16 %v2661
    %v2701 = vunpack.c.l.b16 %v2662
    %v2702 = vunpack.c.l.b16 %v2663
    %v2703 = vunpack.c.l.b16 %v2664
    %v2704 = vpack.c.b16 %v2689, %v2688
    %v2705 = vpack.c.b16 %v2691, %v2690
    %v2706 = vpack.c.b16 %v2693, %v2692
    %v2707 = vpack.c.b16 %v2695, %v2694
    %v2708 = vpack.c.b16 %v2697, %v2696
    %v2709 = vpack.c.b16 %v2699, %v2698
    %v2710 = vpack.c.b16 %v2701, %v2700
    %v2711 = vpack.c.b16 %v2703, %v2702
    %2720 = vmatprep.subr.bf16.mxu0 0
    %2721 = vmatpush1.bf16.msra.mxu0 %v2711
    %2722 = vmatprep.subr.bf16.mxu0 0
    %2723 = vmatpush1.bf16.msra.mxu0 %v2710
    %2724 = vmatprep.subr.bf16.mxu0 0
    %2725 = vmatpush1.bf16.msra.mxu0 %v2709
    %2726 = vmatprep.subr.bf16.mxu0 0
    %2727 = vmatpush1.bf16.msra.mxu0 %v2708
    %2728 = vmatprep.subr.bf16.mxu0 0
    %2729 = vmatpush1.bf16.msra.mxu0 %v2707
    %2730 = vmatprep.subr.bf16.mxu0 0
    %2731 = vmatpush1.bf16.msra.mxu0 %v2706
    %2732 = vmatprep.subr.bf16.mxu0 0
    %2733 = vmatpush1.bf16.msra.mxu0 %v2705
    %2734 = vmatprep.subr.bf16.mxu0 0
    %2735 = vmatpush1.bf16.msra.mxu0 %v2704
    %2736 = vmatprep.subr.bf16.mxu0 0
    %2737 = vmatpush2.bf16.msra.mxu0 0
    %2738 = vmatprep.subr.bf16.mxu0 0
    %2739 = vmatpush2.bf16.msra.mxu0 0
    %2740 = vmatprep.subr.bf16.mxu0 0
    %2741 = vmatpush2.bf16.msra.mxu0 0
    %2742 = vmatprep.subr.bf16.mxu0 0
    %2743 = vmatpush2.bf16.msra.mxu0 0
    %2744 = vmatprep.subr.bf16.mxu0 0
    %2745 = vmatpush2.bf16.msra.mxu0 0
    %2746 = vmatprep.subr.bf16.mxu0 0
    %2747 = vmatpush2.bf16.msra.mxu0 0
    %2748 = vmatprep.subr.bf16.mxu0 0
    %2749 = vmatpush2.bf16.msra.mxu0 0
    %2750 = vmatprep.subr.bf16.mxu0 0
    %2751 = vmatpush2.bf16.msra.mxu0 0
    %2752 = vmatprep.mubr.bf16.mxu0 0
    %2753 = vmatmul.mubr.bf16.gmra.mxu0 %v2648
    %v2754 = vpop.f32.mrf.mxu0
    %v2755 = vadd.f32 %v2670, %v2754
    %v2756 = vpop.f32.mrf.mxu0
    %v2757 = vpop.f32.mrf.mxu0
    %v2758 = vadd.f32 %v2670, %v2757
    %v2759 = vpop.f32.mrf.mxu0
    %2760 = vdwg.mxu0
    %v2761 = vlaneseq
    %v2762 = vand.u32 %v2761, 127
    %vm2763 = vcmp.lt.s32.totalorder %v2762, 10
    %v2764 = vsel %vm2763, %v2755, -1e+30
    %v2765 = vsel %vm2763, %v2758, -1e+30
    %2766 = vmax.xlane.f32.xlu0 %v2764
    %v2767 = vpop.xlane.xlu0 %2766
    %2768 = vmax.xlane.f32.xlu0 %v2765
    %v2769 = vpop.xlane.xlu0 %2768
    %v2770 = vsub.f32 %v2764, %v2767
    %v2771 = vsub.f32 %v2765, %v2769
    %v2772 = vmul.f32 %v2770, 1.442695
    %v2773 = vpow.pop %v2772
    %v2774 = vmul.f32 %v2771, 1.442695
    %v2775 = vpow.pop %v2774
    %2776 = vadd.xlane.f32.xlu0 %v2773
    %v2777 = vpop.xlane.xlu0 %2776
    %2778 = vadd.xlane.f32.xlu0 %v2775
    %v2779 = vpop.xlane.xlu0 %2778
    %v2780 = vrcp.pop %v2777
    %v2781 = vrcp.pop %v2779
    %v2782 = vmul.f32 %v2773, %v2780
    %v2783 = vmul.f32 %v2775, %v2781
    %v2784 = vsel %vm2763, %v2782, -1e+30
    %v2785 = vsel %vm2763, %v2783, -1e+30
    %v2786 = vsub.f32 %v2784, 1.0
    %v2787 = vsub.f32 %v2785, 1.0
    %v2788 = vmul.f32 %v2786, 1.442695
    %v2789 = vpow.pop %v2788
    %v2790 = vmul.f32 %v2787, 1.442695
    %v2791 = vpow.pop %v2790
    %2792 = vadd.xlane.f32.xlu0 %v2789
    %v2793 = vpop.xlane.xlu0 %2792
    %2794 = vadd.xlane.f32.xlu0 %v2791
    %v2795 = vpop.xlane.xlu0 %2794
    %v2796 = vlog2.pop %v2793
    %v2797 = vmul.f32 %v2796, 0.6931472
    %v2798 = vlog2.pop %v2795
    %v2799 = vmul.f32 %v2798, 0.6931472
    %v2800 = vadd.f32 %v2797, 1.0
    %v2801 = vadd.f32 %v2799, 1.0
    %v2802 = vld [vmem:[%s1] sm:$0xff]
    %v2803 = vld [vmem:[%s1 + $0x8] sm:$0xff]
    %2804 = vset.pattern.permute.xlu0 0
    %2805 = vperm.xlu0 %2804, %v2802
    %v2806 = vpop.permute.xlu0 %2805
    %2807 = vset.pattern.permute.xlu0 0
    %2808 = vperm.xlu0 %2807, %v2803
    %v2809 = vpop.permute.xlu0 %2808
    %vm2810 = vcmp.eq.s32.totalorder %v2762, %v2806
    %vm2811 = vcmp.eq.s32.totalorder %v2762, %v2809
    %v2812 = vsel %vm2810, 1, 0
    %v2813 = vsel %vm2811, 1, 0
    %v2814 = vcvt.s32.f32 %v2812
    %v2815 = vcvt.s32.f32 %v2813
    %v2816 = vmul.f32 %v2814, %v2782
    %v2817 = vmul.f32 %v2815, %v2783
    %2818 = vadd.xlane.f32.xlu0 %v2816
    %v2819 = vpop.xlane.xlu0 %2818
    %2820 = vadd.xlane.f32.xlu0 %v2817
    %v2821 = vpop.xlane.xlu0 %2820
    %v2822 = vsub.f32 %v2800, %v2819
    %v2823 = vsub.f32 %v2801, %v2821
    %s2824 = smul.u32 0, 16
    %v2825 = vlaneseq
    %v2826 = vshrl.u32 %v2825, 7
    %v2827 = vadd.s32 %v2826, 8
    %v2828 = vstv %s2824
    %v2829 = vadd.s32 %v2828, %v2826
    %v2830 = vadd.s32 %v2828, %v2827
    %vm2831 = vcmp.lt.s32.totalorder %v2829, 2
    %vm2832 = vcmp.lt.s32.totalorder %v2830, 2
    %v2833 = vsel %vm2831, %v2822, 0.0
    %v2834 = vsel %vm2832, %v2823, 0.0
    %v2835 = vadd.f32 %v2833, %v2834
    %v2836 = vrot.slane %v2835, 4
    %v2837 = vadd.f32 %v2835, %v2836
    %v2838 = vrot.slane %v2837, 2
    %v2839 = vadd.f32 %v2837, %v2838
    %v2840 = vrot.slane %v2839, 1
    %v2841 = vadd.f32 %v2839, %v2840
    %v2842 = vpack.c.bf16 %v2783, %v2782
    %v2844 = vunpack.c.l.b16 %v2842
    %v2845 = vunpack.c.h.b16 %v2842
    %v2846 = vpack.c.b16 %v2844, %v2844
    %v2847 = vpack.c.b16 %v2845, %v2845
    %2850 = vst [vmem:[#allocation13] sm:$0xf] %v2846
    %2851 = vst [vmem:[#allocation13 + $0x4] sm:$0xf] %v2847
    %2852 = vst [vmem:[#allocation14] sm:$0xff] %v2841
    // Predicated region
    $region74: #{tpu_custom_call.1} parent=1 // pred_check
      _
    $region75: #{tpu_custom_call.1} parent=1 // pred_check_branch
      %2854 = sbr.rel (0) target = $region77
    $region76: #{tpu_custom_call.1} parent=1 // pred_region
      %s2856 = ssub.s32 128, 128
      %2857 = vsyncadd [#allocation4], %s2856
      %s2858 = sshll.u32 [#allocation13], 4
      %s2859 = int_to_ptr.vmem [resolvable:$true] %s2858
      %2864 = dma.vmem_to_hbm [thread:$0]  %s2859, 128, %s12, [#allocation4], 64, 64, 4
    $region77: #{tpu_custom_call.1} parent=1 // pred_fallthru
      _
    // Predicated region
    $region78: #{tpu_custom_call.1} parent=1 // pred_check
      _
    $region79: #{tpu_custom_call.1} parent=1 // pred_check_branch
      %2866 = sbr.rel (0) target = $region81
    $region80: #{tpu_custom_call.1} parent=1 // pred_region
      %s2868 = ssub.s32 128, 128
      %2869 = vsyncadd [#allocation15], %s2868
      %s2871 = sshll.u32 [#allocation14], 4
      %s2872 = int_to_ptr.vmem [resolvable:$true] %s2871
      %2874 = dma.vmem_to_hbm [thread:$0]  %s2872, 128, %s13, [#allocation15]
    $region81: #{tpu_custom_call.1} parent=1 // pred_fallthru
      _
    // Predicated region
    $region82: #{tpu_custom_call.1} parent=1 // pred_check
      _
    $region83: #{tpu_custom_call.1} parent=1 // pred_check_branch
      %2876 = sbr.rel (0) target = $region85
    $region84: #{tpu_custom_call.1} parent=1 // pred_region
      %2877 = dma.done [#allocation4], 128
    $region85: #{tpu_custom_call.1} parent=1 // pred_fallthru
      _
    // Predicated region
    $region86: #{tpu_custom_call.1} parent=1 // pred_check
      _
    $region87: #{tpu_custom_call.1} parent=1 // pred_check_branch
      %2879 = sbr.rel (0) target = $region89
    $region88: #{tpu_custom_call.1} parent=1 // pred_region
      %2880 = dma.done [#allocation15], 128
    $region89: #{tpu_custom_call.1} parent=1 // pred_fallthru
      _
    %2881 = vsyncpa [#allocation3], 1
    %2882 = vsyncpa [#allocation6], 1
    %2883 = vsyncpa [#allocation9], 1
    %2884 = vsyncpa [#allocation12], 1
    %2885 = vsyncpa [#allocation4], 1
    %2886 = vsyncpa [#allocation15], 1

</llo_original>
